<compile_context>
chip_gen: v7x
topology: tpu7x:2x2x1
jax: 0.10.0
libtpu: 0.0.40
codegen_flags: <defaults>
</compile_context>

<pallas_src>
import jax
import jax.numpy as jnp
from jax.experimental import pallas as pl
from jax.experimental.pallas import tpu as pltpu


def _metrix_head_kernel(feats_ref, w_ref, b_ref, out_ref):
    # feats_ref: (tb, HW, C) bf16   w_ref: (C, E) bf16   b_ref: (1, E) f32
    # out_ref:   (tb, 1, E) f32
    f = feats_ref[...]                                        # bf16, no full-tile upcast
    hw = f.shape[1]

    # AdaptiveAvgPool2d(1): sublane-axis sum with f32 accumulation.
    s = jnp.sum(f, axis=1, dtype=jnp.float32)                 # (tb, C) f32
    avg = s * jnp.float32(1.0 / hw)
    # AdaptiveMaxPool2d(1): max in bf16 (exact on bf16 inputs), then upcast.
    mx = jnp.max(f, axis=1).astype(jnp.float32)               # (tb, C) f32
    pooled = (avg + mx).astype(jnp.bfloat16)                  # (tb, C) lane-dense MXU LHS

    # Linear(512, E) on the MXU, f32 accumulator, bias in f32.
    emb = jnp.dot(pooled, w_ref[...],
                  preferred_element_type=jnp.float32) + b_ref[...]   # (tb, E) f32

    # F.normalize(x, dim=1): x * rsqrt(max(sum(x^2), 1e-24)) == x / max(||x||, 1e-12).
    sq = jnp.sum(emb * emb, axis=1, keepdims=True)            # (tb, 1)
    inv = jax.lax.rsqrt(jnp.maximum(sq, jnp.float32(1e-24)))  # EUP rsqrt (free slot)
    out_ref[:, 0, :] = (emb * inv).astype(out_ref.dtype)


def _pick_block_b(B):
    # Bounded batch tiles (<= 16 samples, ~0.2 MB bf16/sample -> <= ~3.2 MB/tile, so a
    # double-buffered pipeline fits comfortably in the portable 32 MB VMEM budget),
    # and at least 2 grid steps when possible so the batch axis can pipeline / shard
    # across v7x's two TensorCores.
    if B <= 1:
        return 1
    for tb in (16, 8, 4, 2, 1):
        if B % tb == 0 and B // tb >= 2:
            return tb
    return 1


def metrix_head(feats_nchw, w_ce, b_e, *, block_b=None):
    """feats_nchw: (B, C, H, W) backbone features (f32 or bf16).
    w_ce: (C, E) linear weight (transposed vs. PyTorch's (E, C)).  b_e: (E,) bias."""
    B, C, H, W = feats_nchw.shape
    HW = H * W
    E = w_ce.shape[1]

    # Re-layout to (B, HW, C): spatial on sublanes, channels lane-dense; cast to bf16
    # so the dominant HBM traffic is halved (layout plumbing outside the kernel).
    feats = jnp.transpose(feats_nchw, (0, 2, 3, 1)).reshape(B, HW, C).astype(jnp.bfloat16)
    w = w_ce.astype(jnp.bfloat16)
    b2 = b_e.reshape(1, E).astype(jnp.float32)

    tb = block_b if block_b is not None else _pick_block_b(B)
    assert B % tb == 0, "batch tile must divide batch"
    grid = (B // tb,)

    out3 = pl.pallas_call(
        _metrix_head_kernel,
        out_shape=jax.ShapeDtypeStruct((B, 1, E), jnp.float32),
        grid=grid,
        in_specs=[
            # Batch-tiled features: last two dims are the full (HW, C) extents.
            pl.BlockSpec((tb, HW, C), lambda i: (i, 0, 0)),
            # Weight / bias block index constant across batch tiles -> fetched once,
            # stays resident; kernel remains feats-bandwidth-bound.
            pl.BlockSpec((C, E), lambda i: (0, 0)),
            pl.BlockSpec((1, E), lambda i: (0, 0)),
        ],
        out_specs=pl.BlockSpec((tb, 1, E), lambda i: (i, 0, 0)),
        compiler_params=pltpu.CompilerParams(
            dimension_semantics=("parallel",),        # independent batch tiles
            vmem_limit_bytes=32 * 1024 * 1024,        # explicit, portable budget
        ),
    )(feats, w, b2)
    return out3.reshape(B, E)


def _reference(feats_nchw, w_ce, b_e):
    # Pure-JAX reference mirroring the kernel's dtype strategy (bf16 inputs,
    # f32 accumulation) so the comparison isolates structural bugs.
    B, C, H, W = feats_nchw.shape
    HW = H * W
    f = jnp.transpose(feats_nchw, (0, 2, 3, 1)).reshape(B, HW, C).astype(jnp.bfloat16)
    f32 = f.astype(jnp.float32)
    pooled = jnp.sum(f32, axis=1) * jnp.float32(1.0 / HW) + jnp.max(f32, axis=1)
    emb = jnp.dot(pooled.astype(jnp.bfloat16), w_ce.astype(jnp.bfloat16),
                  preferred_element_type=jnp.float32) + b_e[None, :].astype(jnp.float32)
    norm = jnp.sqrt(jnp.sum(emb * emb, axis=1, keepdims=True))
    return emb / jnp.maximum(norm, 1e-12)


if __name__ == "__main__":
    # Module constants: net_out_channels=512, net_out_size=14, embed_dim=512 (default).
    B, C, S, E = 2, 512, 14, 512

    key = jax.random.PRNGKey(0)
    k_feat, k_w, k_b = jax.random.split(key, 3)

    # Backbone features (stand-in for resnet50 output, already viewed to (B, 512, 14, 14)).
    feats = jax.random.normal(k_feat, (B, C, S, S), dtype=jnp.float32)

    # Deterministic Linear(512, embed_dim) params; weight passed as (C, E) = W^T.
    w = jax.random.normal(k_w, (C, E), dtype=jnp.float32) * (1.0 / jnp.sqrt(C))
    b = jax.random.normal(k_b, (E,), dtype=jnp.float32) * 0.01

    out = metrix_head(feats, w, b)
    out = jax.block_until_ready(out)

    ref = _reference(feats, w, b)
    assert out.shape == (B, E)
    assert jnp.allclose(out, ref, atol=1e-3, rtol=1e-3), "mismatch vs reference"

    print("KERNEL_OK")
</pallas_src>

<mosaic_0001>
module attributes {stable_mosaic.version = 11 : i64} {
  func.func @_metrix_head_kernel(%arg0: i32, %arg1: memref<1x196x512xbf16, #tpu.memory_space<vmem>>, %arg2: memref<512x512xbf16, #tpu.memory_space<vmem>>, %arg3: memref<1x512xf32, #tpu.memory_space<vmem>>, %arg4: memref<1x1x512xf32, #tpu.memory_space<vmem>>) attributes {dimension_semantics = [#tpu.dimension_semantics<parallel>], iteration_bounds = array<i64: 2>, scalar_prefetch = 0 : i64, scratch_operands = 0 : i64, tpu.core_type = #tpu.core_type<tc>, window_params = [{transform_indices = @transform_0, window_bounds = array<i64: 1, 196, 512>}, {pipeline_mode = #tpu.pipeline_mode<synchronous>, transform_indices = @transform_1, window_bounds = array<i64: 512, 512>}, {pipeline_mode = #tpu.pipeline_mode<synchronous>, transform_indices = @transform_2, window_bounds = array<i64: 1, 512>}, {transform_indices = @transform_3, window_bounds = array<i64: 1, 1, 512>}]} {
    %c0 = arith.constant 0 : index
    %c0_0 = arith.constant 0 : index
    %c0_1 = arith.constant 0 : index
    %0 = vector.load %arg1[%c0, %c0_0, %c0_1] : memref<1x196x512xbf16, #tpu.memory_space<vmem>>, vector<1x196x512xbf16>
    %1 = arith.extf %0 : vector<1x196x512xbf16> to vector<1x196x512xf32>
    %cst = arith.constant dense<0.000000e+00> : vector<1x512xf32>
    %2 = vector.multi_reduction <add>, %1, %cst [1] : vector<1x196x512xf32> to vector<1x512xf32>
    %cst_2 = arith.constant 0.00510204071 : f32
    %3 = vector.broadcast %cst_2 : f32 to vector<1x512xf32>
    %4 = arith.mulf %2, %3 : vector<1x512xf32>
    %cst_3 = arith.constant dense<0xFF80> : vector<1x512xbf16>
    %5 = vector.multi_reduction <maximumf>, %0, %cst_3 [1] : vector<1x196x512xbf16> to vector<1x512xbf16>
    %6 = arith.extf %5 : vector<1x512xbf16> to vector<1x512xf32>
    %7 = arith.addf %4, %6 : vector<1x512xf32>
    %8 = arith.truncf %7 : vector<1x512xf32> to vector<1x512xbf16>
    %c0_4 = arith.constant 0 : index
    %c0_5 = arith.constant 0 : index
    %9 = vector.load %arg2[%c0_4, %c0_5] : memref<512x512xbf16, #tpu.memory_space<vmem>>, vector<512x512xbf16>
    %cst_6 = arith.constant dense<0.000000e+00> : vector<1x512xf32>
    %10 = tpu.matmul %8, %9, %cst_6 {dimension_numbers = #tpu.dot_dimension_numbers<[1], [0], [0], [1], [0, 0, 1, 1], [], []>} : vector<1x512xbf16>, vector<512x512xbf16>, vector<1x512xf32> -> vector<1x512xf32>
    %c0_7 = arith.constant 0 : index
    %c0_8 = arith.constant 0 : index
    %11 = vector.load %arg3[%c0_7, %c0_8] : memref<1x512xf32, #tpu.memory_space<vmem>>, vector<1x512xf32>
    %12 = arith.addf %10, %11 : vector<1x512xf32>
    %13 = arith.mulf %12, %12 : vector<1x512xf32>
    %cst_9 = arith.constant dense<0.000000e+00> : vector<1xf32>
    %14 = vector.multi_reduction <add>, %13, %cst_9 [1] : vector<1x512xf32> to vector<1xf32>
    %15 = vector.shape_cast %14 : vector<1xf32> to vector<1x1xf32>
    %cst_10 = arith.constant 1.000000e-24 : f32
    %16 = vector.broadcast %cst_10 : f32 to vector<1x1xf32>
    %17 = arith.maximumf %15, %16 : vector<1x1xf32>
    %18 = math.rsqrt %17 : vector<1x1xf32>
    %19 = vector.broadcast %18 : vector<1x1xf32> to vector<1x512xf32>
    %20 = arith.mulf %12, %19 : vector<1x512xf32>
    %c0_11 = arith.constant 0 : index
    %c0_12 = arith.constant 0 : index
    %c0_13 = arith.constant 0 : index
    %21 = vector.load %arg4[%c0_11, %c0_12, %c0_13] : memref<1x1x512xf32, #tpu.memory_space<vmem>>, vector<1x1x512xf32>
    %22 = vector.shape_cast %21 : vector<1x1x512xf32> to vector<1x512xf32>
    %23 = vector.shape_cast %20 : vector<1x512xf32> to vector<1x1x512xf32>
    tpu.vector_store %arg4[%c0_11, %c0_12, %c0_13], %23 {strides = array<i32>} : memref<1x1x512xf32, #tpu.memory_space<vmem>>, vector<1x1x512xf32>,
    return
  }
  func.func @transform_0(%arg0: i32) -> (i32, i32, i32) {
    %c0_i32 = arith.constant 0 : i32
    %c0_i32_0 = arith.constant 0 : i32
    %c0_i32_1 = arith.constant 0 : i32
    return %arg0, %c0_i32, %c0_i32_0 : i32, i32, i32
  }
  func.func @transform_1(%arg0: i32) -> (i32, i32) {
    %c0_i32 = arith.constant 0 : i32
    %c0_i32_0 = arith.constant 0 : i32
    %c0_i32_1 = arith.constant 0 : i32
    return %c0_i32, %c0_i32_0 : i32, i32
  }
  func.func @transform_2(%arg0: i32) -> (i32, i32) {
    %c0_i32 = arith.constant 0 : i32
    %c0_i32_0 = arith.constant 0 : i32
    %c0_i32_1 = arith.constant 0 : i32
    return %c0_i32, %c0_i32_0 : i32, i32
  }
  func.func @transform_3(%arg0: i32) -> (i32, i32, i32) {
    %c0_i32 = arith.constant 0 : i32
    %c0_i32_0 = arith.constant 0 : i32
    %c0_i32_1 = arith.constant 0 : i32
    return %arg0, %c0_i32, %c0_i32_0 : i32, i32, i32
  }
}

</mosaic_0001>

<llo_original>
// kernel: tpu_custom_call.1
$region0: #{tpu_custom_call.1}
  #allocation0 [shape = 'u32[]', space=smem, size = 0x4, offset = 0x4, fixed_abs, tag = 'smem constant byte address 0x4 - core index']
  #allocation1 [shape = 'u32[144,128]{1,0:T(1,128)}', space=vmem, size = 0x12000, scoped, tag = 'internal scratch']
  %s0 = inlined_call_operand.vmem [shape: bf16[2,196,512], index: 0, kind: input, shape index: {}]
  %s1 = inlined_call_operand.vmem [shape: bf16[512,512], index: 1, kind: input, shape index: {}]
  %s2 = inlined_call_operand.vmem [shape: f32[1,512], index: 2, kind: input, shape index: {}]
  %s3 = inlined_call_operand.hbm [shape: f32[2,1,512], index: 3, kind: output, shape index: {}]
  %s4 = sld [smem:[#allocation0]]
  $region45: #{tpu_custom_call.1} parent=0
    _
  %s6 = ssub.s32 1, %s4
  %s7 = scalar_select 0, %s6, %s4
  $region1: #{tpu_custom_call.1} parent=0
    #allocation2 [shape = 'u8[4096]{0}', space=vmem, size = 0x1000, scoped, tag = 'output window, operand 0']
    #allocation3 [shape = 's32[2]{0}', space=sflag, size = 0x8, scoped, tag = 'scoped memory for tpu_custom_call.1']
    %8 = vsyncpa [#allocation3], 0
    %s9 = scalar_lea.sflag [#allocation3], 1
    %10 = vsyncpa %s9, 0
    loop: start=0, step=1, limit=4
    $region2: #{tpu_custom_call.1} parent=1 // loop_pre_header
      _
    $region3: #{tpu_custom_call.1} parent=1 // loop_header
      %s12 = sphi 0, %s16
      %p13 = scmp.ge.s32.totalorder %s12, 4
      %s22 = sphi 0, %s24
      %s25 = sphi 0, %s22
      %s26 = sphi 0, %s25
      %s42 = sphi 0, %s26
      %s46 = sphi 0, %s46
      %s48 = sphi 0, %s46
      %s49 = sphi 0, %s48
      %s63 = sphi 0, %s49
      %s67 = sphi 0, %s67
      %s69 = sphi 0, %s67
      %s70 = sphi 0, %s69
      %s84 = sphi 0, %s70
      %s90 = sphi 0, %s92
      %s93 = sphi 0, %s90
      %s94 = sphi 0, %s93
      %s110 = sphi 0, %s94
    $region4: #{tpu_custom_call.1} parent=1 // loop_header_branch
      %15 = sbr.rel (%p13) target = $region8
    $region5: #{tpu_custom_call.1} parent=1 // loop_body
      %s17 = ssub.s32 %s12, 1
      %s18 = ssub.s32 %s12, 2
      %s19 = sadd.s32 %s12, 1
      %s20 = ssub.s32 %s12, %s19
      %p21 = scmp.eq.s32.totalorder %s20, 0
      %s23 = sadd.s32 %s22, 1
      %s24 = scalar_select %p21, %s22, %s23
      %p27 = pneg %p21
      %p28 = scmp.eq.s32.totalorder %s12, 1
      %p29 = por %p27, %p28
      %p30 = scmp.ne.s32.totalorder %s22, %s25
      %p31 = scmp.eq.s32.totalorder %s12, 0
      %p32 = por %p30, %p31
      %p33 = scmp.ne.s32.totalorder %s22, %s25
      %p34 = scmp.eq.s32.totalorder %s17, 1
      %p35 = por %p33, %p34
      %p36 = scmp.ne.s32.totalorder %s25, %s26
      %p37 = scmp.eq.s32.totalorder %s17, 0
      %p38 = por %p36, %p37
      %p39 = scmp.ne.s32.totalorder %s25, %s26
      %p40 = scmp.eq.s32.totalorder %s18, 1
      %p41 = por %p39, %p40
      %p43 = scmp.ne.s32.totalorder %s26, %s42
      %p44 = scmp.eq.s32.totalorder %s18, 0
      %p45 = por %p43, %p44
      %s47 = sadd.s32 %s46, 1
      %p50 = scmp.eq.s32.totalorder %s12, 1
      %p51 = scmp.ne.s32.totalorder %s46, %s48
      %p52 = scmp.eq.s32.totalorder %s12, 0
      %p53 = por %p51, %p52
      %p54 = scmp.ne.s32.totalorder %s46, %s48
      %p55 = scmp.eq.s32.totalorder %s17, 1
      %p56 = por %p54, %p55
      %p57 = scmp.ne.s32.totalorder %s48, %s49
      %p58 = scmp.eq.s32.totalorder %s17, 0
      %p59 = por %p57, %p58
      %p60 = scmp.ne.s32.totalorder %s48, %s49
      %p61 = scmp.eq.s32.totalorder %s18, 1
      %p62 = por %p60, %p61
      %p64 = scmp.ne.s32.totalorder %s49, %s63
      %p65 = scmp.eq.s32.totalorder %s18, 0
      %p66 = por %p64, %p65
      %s68 = sadd.s32 %s67, 1
      %p71 = scmp.eq.s32.totalorder %s12, 1
      %p72 = scmp.ne.s32.totalorder %s67, %s69
      %p73 = scmp.eq.s32.totalorder %s12, 0
      %p74 = por %p72, %p73
      %p75 = scmp.ne.s32.totalorder %s67, %s69
      %p76 = scmp.eq.s32.totalorder %s17, 1
      %p77 = por %p75, %p76
      %p78 = scmp.ne.s32.totalorder %s69, %s70
      %p79 = scmp.eq.s32.totalorder %s17, 0
      %p80 = por %p78, %p79
      %p81 = scmp.ne.s32.totalorder %s69, %s70
      %p82 = scmp.eq.s32.totalorder %s18, 1
      %p83 = por %p81, %p82
      %p85 = scmp.ne.s32.totalorder %s70, %s84
      %p86 = scmp.eq.s32.totalorder %s18, 0
      %p87 = por %p85, %p86
      %s88 = ssub.s32 %s12, %s19
      %p89 = scmp.eq.s32.totalorder %s88, 0
      %s91 = sadd.s32 %s90, 1
      %s92 = scalar_select %p89, %s90, %s91
      %p95 = pneg %p89
      %p96 = scmp.eq.s32.totalorder %s12, 1
      %p97 = por %p95, %p96
      %p98 = scmp.ne.s32.totalorder %s90, %s93
      %p99 = scmp.eq.s32.totalorder %s12, 0
      %p100 = por %p98, %p99
      %p101 = scmp.ne.s32.totalorder %s90, %s93
      %p102 = scmp.eq.s32.totalorder %s17, 1
      %p103 = por %p101, %p102
      %p104 = scmp.ne.s32.totalorder %s93, %s94
      %p105 = scmp.eq.s32.totalorder %s17, 0
      %p106 = por %p104, %p105
      %p107 = scmp.ne.s32.totalorder %s93, %s94
      %p108 = scmp.eq.s32.totalorder %s18, 1
      %p109 = por %p107, %p108
      %p111 = scmp.ne.s32.totalorder %s94, %s110
      %p112 = scmp.eq.s32.totalorder %s18, 0
      %p113 = por %p111, %p112
      %p114 = scmp.le.s32.totalorder 1, %s12
      %p115 = scmp.lt.s32.totalorder %s12, 3
      %p116 = pnand %p114, %p115
      %p117 = pneg %p116
      // Predicated region
      $region9: #{tpu_custom_call.1} parent=5 // pred_check
        _
      $region10: #{tpu_custom_call.1} parent=5 // pred_check_branch
        %119 = sbr.rel (%p116) target = $region12
      $region11: #{tpu_custom_call.1} parent=5 // pred_region
        %s120 = ssub.s32 %s12, 1
        // Predicated region
        $region13: #{tpu_custom_call.1} parent=11 // pred_check
          %p121 = pneg %p59
        $region14: #{tpu_custom_call.1} parent=11 // pred_check_branch
          %123 = sbr.rel (%p121) target = $region16
        $region15: #{tpu_custom_call.1} parent=11 // pred_region
          _
        $region16: #{tpu_custom_call.1} parent=11 // pred_fallthru
          _
        // Predicated region
        $region17: #{tpu_custom_call.1} parent=11 // pred_check
          %p124 = pneg %p80
        $region18: #{tpu_custom_call.1} parent=11 // pred_check_branch
          %126 = sbr.rel (%p124) target = $region20
        $region19: #{tpu_custom_call.1} parent=11 // pred_region
          _
        $region20: #{tpu_custom_call.1} parent=11 // pred_fallthru
          _
      $region12: #{tpu_custom_call.1} parent=5 // pred_fallthru
        _
      %p127 = scmp.lt.s32.totalorder %s12, 2
      // Predicated region
      $region21: #{tpu_custom_call.1} parent=5 // pred_check
        %p128 = pneg %p127
      $region22: #{tpu_custom_call.1} parent=5 // pred_check_branch
        %130 = sbr.rel (%p128) target = $region24
      $region23: #{tpu_custom_call.1} parent=5 // pred_region
        // Predicated region
        $region25: #{tpu_custom_call.1} parent=23 // pred_check
          %p131 = pneg %p32
        $region26: #{tpu_custom_call.1} parent=23 // pred_check_branch
          %133 = sbr.rel (%p131) target = $region28
        $region27: #{tpu_custom_call.1} parent=23 // pred_region
          %p134 = scmp.lt.s32.totalorder %s12, 1
          %s135 = scalar_select %p134, %s12, 1
          %s136 = smul.addr %s135, 100
          %s137 = smul.addr %s136, 4
          %s138 = scalar_lea.vmem %s0, %s137
        $region28: #{tpu_custom_call.1} parent=23 // pred_fallthru
          _
      $region24: #{tpu_custom_call.1} parent=5 // pred_fallthru
        _
      %p139 = scmp.le.s32.totalorder 1, %s12
      %p140 = scmp.lt.s32.totalorder %s12, 3
      %p141 = pnand %p139, %p140
      %p142 = pneg %p141
      // Predicated region
      $region29: #{tpu_custom_call.1} parent=5 // pred_check
        _
      $region30: #{tpu_custom_call.1} parent=5 // pred_check_branch
        %144 = sbr.rel (%p141) target = $region32
      $region31: #{tpu_custom_call.1} parent=5 // pred_region
        %s145 = ssub.s32 %s12, 1
        %p146 = scmp.lt.s32.totalorder %s17, 1
        %s147 = scalar_select %p146, %s17, 1
        %s148 = smul.addr %s147, 100
        %s149 = smul.addr %s148, 4
        %s150 = scalar_lea.vmem %s0, %s149
        %p151 = pneg %p38
        %p152 = pneg %p35
        %p153 = pneg %p59
        %p154 = pneg %p56
        %p155 = pneg %p80
        %p156 = pneg %p77
        %p157 = pneg %p106
        %p158 = pneg %p103
        %s159 = sand.u32 %s93, 1
        %s160 = scalar_lea.sflag [#allocation3], %s159
        %s161 = sand.u32 %s93, 1
        %s162 = smul.addr %s161, 4
        %s163 = scalar_lea.vmem [#allocation2], %s162
        %p164 = scmp.lt.s32.totalorder %s17, 1
        %s165 = scalar_select %p164, %s17, 1
        %s166 = smul.addr %s165, 100
        %s167 = smul.addr %s166, 4
        %s168 = scalar_lea.vmem %s0, %s167
        %v170 = vld [vmem:[%s168] sm:$0xff]
        %v171 = vld [vmem:[%s168 + $0x8] sm:$0xff]
        %v172 = vld [vmem:[%s168 + $0x10] sm:$0xff]
        %v173 = vld [vmem:[%s168 + $0x18] sm:$0xff]
        %v174 = vld [vmem:[%s168 + $0x20] sm:$0xff]
        %v175 = vld [vmem:[%s168 + $0x28] sm:$0xff]
        %v176 = vld [vmem:[%s168 + $0x30] sm:$0xff]
        %v177 = vld [vmem:[%s168 + $0x38] sm:$0xff]
        %v178 = vld [vmem:[%s168 + $0x40] sm:$0xff]
        %v179 = vld [vmem:[%s168 + $0x48] sm:$0xff]
        %v180 = vld [vmem:[%s168 + $0x50] sm:$0xff]
        %v181 = vld [vmem:[%s168 + $0x58] sm:$0xff]
        %v182 = vld [vmem:[%s168 + $0x60] sm:$0xff]
        %v183 = vld [vmem:[%s168 + $0x68] sm:$0xff]
        %v184 = vld [vmem:[%s168 + $0x70] sm:$0xff]
        %v185 = vld [vmem:[%s168 + $0x78] sm:$0xff]
        %v186 = vld [vmem:[%s168 + $0x80] sm:$0xff]
        %v187 = vld [vmem:[%s168 + $0x88] sm:$0xff]
        %v188 = vld [vmem:[%s168 + $0x90] sm:$0xff]
        %v189 = vld [vmem:[%s168 + $0x98] sm:$0xff]
        %v190 = vld [vmem:[%s168 + $0xa0] sm:$0xff]
        %v191 = vld [vmem:[%s168 + $0xa8] sm:$0xff]
        %v192 = vld [vmem:[%s168 + $0xb0] sm:$0xff]
        %v193 = vld [vmem:[%s168 + $0xb8] sm:$0xff]
        %v194 = vld [vmem:[%s168 + $0xc0] sm:$0xff]
        %v195 = vld [vmem:[%s168 + $0xc8] sm:$0xff]
        %v196 = vld [vmem:[%s168 + $0xd0] sm:$0xff]
        %v197 = vld [vmem:[%s168 + $0xd8] sm:$0xff]
        %v198 = vld [vmem:[%s168 + $0xe0] sm:$0xff]
        %v199 = vld [vmem:[%s168 + $0xe8] sm:$0xff]
        %v200 = vld [vmem:[%s168 + $0xf0] sm:$0xff]
        %v201 = vld [vmem:[%s168 + $0xf8] sm:$0xff]
        %v202 = vld [vmem:[%s168 + $0x100] sm:$0xff]
        %v203 = vld [vmem:[%s168 + $0x108] sm:$0xff]
        %v204 = vld [vmem:[%s168 + $0x110] sm:$0xff]
        %v205 = vld [vmem:[%s168 + $0x118] sm:$0xff]
        %v206 = vld [vmem:[%s168 + $0x120] sm:$0xff]
        %v207 = vld [vmem:[%s168 + $0x128] sm:$0xff]
        %v208 = vld [vmem:[%s168 + $0x130] sm:$0xff]
        %v209 = vld [vmem:[%s168 + $0x138] sm:$0xff]
        %v210 = vld [vmem:[%s168 + $0x140] sm:$0xff]
        %v211 = vld [vmem:[%s168 + $0x148] sm:$0xff]
        %v212 = vld [vmem:[%s168 + $0x150] sm:$0xff]
        %v213 = vld [vmem:[%s168 + $0x158] sm:$0xff]
        %v214 = vld [vmem:[%s168 + $0x160] sm:$0xff]
        %v215 = vld [vmem:[%s168 + $0x168] sm:$0xff]
        %v216 = vld [vmem:[%s168 + $0x170] sm:$0xff]
        %v217 = vld [vmem:[%s168 + $0x178] sm:$0xff]
        %v218 = vld [vmem:[%s168 + $0x180] sm:$0x33]
        %v219 = vld [vmem:[%s168 + $0x188] sm:$0x33]
        %v220 = vunpack.c.l.bf16 %v170
        %v221 = vunpack.c.h.bf16 %v170
        %v222 = vunpack.c.l.bf16 %v171
        %v223 = vunpack.c.h.bf16 %v171
        %v224 = vunpack.c.l.bf16 %v172
        %v225 = vunpack.c.h.bf16 %v172
        %v226 = vunpack.c.l.bf16 %v173
        %v227 = vunpack.c.h.bf16 %v173
        %v228 = vunpack.c.l.bf16 %v174
        %v229 = vunpack.c.h.bf16 %v174
        %v230 = vunpack.c.l.bf16 %v175
        %v231 = vunpack.c.h.bf16 %v175
        %v232 = vunpack.c.l.bf16 %v176
        %v233 = vunpack.c.h.bf16 %v176
        %v234 = vunpack.c.l.bf16 %v177
        %v235 = vunpack.c.h.bf16 %v177
        %v236 = vunpack.c.l.bf16 %v178
        %v237 = vunpack.c.h.bf16 %v178
        %v238 = vunpack.c.l.bf16 %v179
        %v239 = vunpack.c.h.bf16 %v179
        %v240 = vunpack.c.l.bf16 %v180
        %v241 = vunpack.c.h.bf16 %v180
        %v242 = vunpack.c.l.bf16 %v181
        %v243 = vunpack.c.h.bf16 %v181
        %v244 = vunpack.c.l.bf16 %v182
        %v245 = vunpack.c.h.bf16 %v182
        %v246 = vunpack.c.l.bf16 %v183
        %v247 = vunpack.c.h.bf16 %v183
        %v248 = vunpack.c.l.bf16 %v184
        %v249 = vunpack.c.h.bf16 %v184
        %v250 = vunpack.c.l.bf16 %v185
        %v251 = vunpack.c.h.bf16 %v185
        %v252 = vunpack.c.l.bf16 %v186
        %v253 = vunpack.c.h.bf16 %v186
        %v254 = vunpack.c.l.bf16 %v187
        %v255 = vunpack.c.h.bf16 %v187
        %v256 = vunpack.c.l.bf16 %v188
        %v257 = vunpack.c.h.bf16 %v188
        %v258 = vunpack.c.l.bf16 %v189
        %v259 = vunpack.c.h.bf16 %v189
        %v260 = vunpack.c.l.bf16 %v190
        %v261 = vunpack.c.h.bf16 %v190
        %v262 = vunpack.c.l.bf16 %v191
        %v263 = vunpack.c.h.bf16 %v191
        %v264 = vunpack.c.l.bf16 %v192
        %v265 = vunpack.c.h.bf16 %v192
        %v266 = vunpack.c.l.bf16 %v193
        %v267 = vunpack.c.h.bf16 %v193
        %v268 = vunpack.c.l.bf16 %v194
        %v269 = vunpack.c.h.bf16 %v194
        %v270 = vunpack.c.l.bf16 %v195
        %v271 = vunpack.c.h.bf16 %v195
        %v272 = vunpack.c.l.bf16 %v196
        %v273 = vunpack.c.h.bf16 %v196
        %v274 = vunpack.c.l.bf16 %v197
        %v275 = vunpack.c.h.bf16 %v197
        %v276 = vunpack.c.l.bf16 %v198
        %v277 = vunpack.c.h.bf16 %v198
        %v278 = vunpack.c.l.bf16 %v199
        %v279 = vunpack.c.h.bf16 %v199
        %v280 = vunpack.c.l.bf16 %v200
        %v281 = vunpack.c.h.bf16 %v200
        %v282 = vunpack.c.l.bf16 %v201
        %v283 = vunpack.c.h.bf16 %v201
        %v284 = vunpack.c.l.bf16 %v202
        %v285 = vunpack.c.h.bf16 %v202
        %v286 = vunpack.c.l.bf16 %v203
        %v287 = vunpack.c.h.bf16 %v203
        %v288 = vunpack.c.l.bf16 %v204
        %v289 = vunpack.c.h.bf16 %v204
        %v290 = vunpack.c.l.bf16 %v205
        %v291 = vunpack.c.h.bf16 %v205
        %v292 = vunpack.c.l.bf16 %v206
        %v293 = vunpack.c.h.bf16 %v206
        %v294 = vunpack.c.l.bf16 %v207
        %v295 = vunpack.c.h.bf16 %v207
        %v296 = vunpack.c.l.bf16 %v208
        %v297 = vunpack.c.h.bf16 %v208
        %v298 = vunpack.c.l.bf16 %v209
        %v299 = vunpack.c.h.bf16 %v209
        %v300 = vunpack.c.l.bf16 %v210
        %v301 = vunpack.c.h.bf16 %v210
        %v302 = vunpack.c.l.bf16 %v211
        %v303 = vunpack.c.h.bf16 %v211
        %v304 = vunpack.c.l.bf16 %v212
        %v305 = vunpack.c.h.bf16 %v212
        %v306 = vunpack.c.l.bf16 %v213
        %v307 = vunpack.c.h.bf16 %v213
        %v308 = vunpack.c.l.bf16 %v214
        %v309 = vunpack.c.h.bf16 %v214
        %v310 = vunpack.c.l.bf16 %v215
        %v311 = vunpack.c.h.bf16 %v215
        %v312 = vunpack.c.l.bf16 %v216
        %v313 = vunpack.c.h.bf16 %v216
        %v314 = vunpack.c.l.bf16 %v217
        %v315 = vunpack.c.h.bf16 %v217
        %v316 = vunpack.c.l.bf16 %v218
        %v317 = vunpack.c.h.bf16 %v218
        %v318 = vunpack.c.l.bf16 %v219
        %v319 = vunpack.c.h.bf16 %v219
        %v320 = vadd.f32 %v220, %v224
        %v321 = vadd.f32 %v320, %v228
        %v322 = vadd.f32 %v321, %v232
        %v323 = vadd.f32 %v322, %v236
        %v324 = vadd.f32 %v323, %v240
        %v325 = vadd.f32 %v324, %v244
        %v326 = vadd.f32 %v325, %v248
        %v327 = vadd.f32 %v326, %v252
        %v328 = vadd.f32 %v327, %v256
        %v329 = vadd.f32 %v328, %v260
        %v330 = vadd.f32 %v329, %v264
        %v331 = vadd.f32 %v330, %v268
        %v332 = vadd.f32 %v331, %v272
        %v333 = vadd.f32 %v332, %v276
        %v334 = vadd.f32 %v333, %v280
        %v335 = vadd.f32 %v334, %v284
        %v336 = vadd.f32 %v335, %v288
        %v337 = vadd.f32 %v336, %v292
        %v338 = vadd.f32 %v337, %v296
        %v339 = vadd.f32 %v338, %v300
        %v340 = vadd.f32 %v339, %v304
        %v341 = vadd.f32 %v340, %v308
        %v342 = vadd.f32 %v341, %v312
        %vm343 = vcmask 1043456
        %v344 = vsel %vm343, %v316, 0.0
        %v345 = vadd.f32 %v342, %v344
        %v346 = vrot.slane %v345, 4
        %v347 = vadd.f32 %v345, %v346
        %v348 = vrot.slane %v347, 2
        %v349 = vadd.f32 %v347, %v348
        %v350 = vrot.slane %v349, 1
        %v351 = vadd.f32 %v349, %v350
        %v352 = vadd.f32 %v221, %v225
        %v353 = vadd.f32 %v352, %v229
        %v354 = vadd.f32 %v353, %v233
        %v355 = vadd.f32 %v354, %v237
        %v356 = vadd.f32 %v355, %v241
        %v357 = vadd.f32 %v356, %v245
        %v358 = vadd.f32 %v357, %v249
        %v359 = vadd.f32 %v358, %v253
        %v360 = vadd.f32 %v359, %v257
        %v361 = vadd.f32 %v360, %v261
        %v362 = vadd.f32 %v361, %v265
        %v363 = vadd.f32 %v362, %v269
        %v364 = vadd.f32 %v363, %v273
        %v365 = vadd.f32 %v364, %v277
        %v366 = vadd.f32 %v365, %v281
        %v367 = vadd.f32 %v366, %v285
        %v368 = vadd.f32 %v367, %v289
        %v369 = vadd.f32 %v368, %v293
        %v370 = vadd.f32 %v369, %v297
        %v371 = vadd.f32 %v370, %v301
        %v372 = vadd.f32 %v371, %v305
        %v373 = vadd.f32 %v372, %v309
        %v374 = vadd.f32 %v373, %v313
        %v375 = vsel %vm343, %v317, 0.0
        %v376 = vadd.f32 %v374, %v375
        %v377 = vrot.slane %v376, 4
        %v378 = vadd.f32 %v376, %v377
        %v379 = vrot.slane %v378, 2
        %v380 = vadd.f32 %v378, %v379
        %v381 = vrot.slane %v380, 1
        %v382 = vadd.f32 %v380, %v381
        %v383 = vadd.f32 %v222, %v226
        %v384 = vadd.f32 %v383, %v230
        %v385 = vadd.f32 %v384, %v234
        %v386 = vadd.f32 %v385, %v238
        %v387 = vadd.f32 %v386, %v242
        %v388 = vadd.f32 %v387, %v246
        %v389 = vadd.f32 %v388, %v250
        %v390 = vadd.f32 %v389, %v254
        %v391 = vadd.f32 %v390, %v258
        %v392 = vadd.f32 %v391, %v262
        %v393 = vadd.f32 %v392, %v266
        %v394 = vadd.f32 %v393, %v270
        %v395 = vadd.f32 %v394, %v274
        %v396 = vadd.f32 %v395, %v278
        %v397 = vadd.f32 %v396, %v282
        %v398 = vadd.f32 %v397, %v286
        %v399 = vadd.f32 %v398, %v290
        %v400 = vadd.f32 %v399, %v294
        %v401 = vadd.f32 %v400, %v298
        %v402 = vadd.f32 %v401, %v302
        %v403 = vadd.f32 %v402, %v306
        %v404 = vadd.f32 %v403, %v310
        %v405 = vadd.f32 %v404, %v314
        %v406 = vsel %vm343, %v318, 0.0
        %v407 = vadd.f32 %v405, %v406
        %v408 = vrot.slane %v407, 4
        %v409 = vadd.f32 %v407, %v408
        %v410 = vrot.slane %v409, 2
        %v411 = vadd.f32 %v409, %v410
        %v412 = vrot.slane %v411, 1
        %v413 = vadd.f32 %v411, %v412
        %v414 = vadd.f32 %v223, %v227
        %v415 = vadd.f32 %v414, %v231
        %v416 = vadd.f32 %v415, %v235
        %v417 = vadd.f32 %v416, %v239
        %v418 = vadd.f32 %v417, %v243
        %v419 = vadd.f32 %v418, %v247
        %v420 = vadd.f32 %v419, %v251
        %v421 = vadd.f32 %v420, %v255
        %v422 = vadd.f32 %v421, %v259
        %v423 = vadd.f32 %v422, %v263
        %v424 = vadd.f32 %v423, %v267
        %v425 = vadd.f32 %v424, %v271
        %v426 = vadd.f32 %v425, %v275
        %v427 = vadd.f32 %v426, %v279
        %v428 = vadd.f32 %v427, %v283
        %v429 = vadd.f32 %v428, %v287
        %v430 = vadd.f32 %v429, %v291
        %v431 = vadd.f32 %v430, %v295
        %v432 = vadd.f32 %v431, %v299
        %v433 = vadd.f32 %v432, %v303
        %v434 = vadd.f32 %v433, %v307
        %v435 = vadd.f32 %v434, %v311
        %v436 = vadd.f32 %v435, %v315
        %v437 = vsel %vm343, %v319, 0.0
        %v438 = vadd.f32 %v436, %v437
        %v439 = vrot.slane %v438, 4
        %v440 = vadd.f32 %v438, %v439
        %v441 = vrot.slane %v440, 2
        %v442 = vadd.f32 %v440, %v441
        %v443 = vrot.slane %v442, 1
        %v444 = vadd.f32 %v442, %v443
        %v445 = vmul.f32 %v351, 0.0051020407
        %v446 = vmul.f32 %v382, 0.0051020407
        %v447 = vmul.f32 %v413, 0.0051020407
        %v448 = vmul.f32 %v444, 0.0051020407
        %v499 = vunpack.c.l.b16 %v170
        %v500 = vunpack.c.h.b16 %v170
        %v501 = vunpack.c.l.b16 %v171
        %v502 = vunpack.c.h.b16 %v171
        %v503 = vunpack.c.l.b16 %v172
        %v504 = vunpack.c.h.b16 %v172
        %v505 = vunpack.c.l.b16 %v173
        %v506 = vunpack.c.h.b16 %v173
        %v507 = vunpack.c.l.b16 %v174
        %v508 = vunpack.c.h.b16 %v174
        %v509 = vunpack.c.l.b16 %v175
        %v510 = vunpack.c.h.b16 %v175
        %v511 = vunpack.c.l.b16 %v176
        %v512 = vunpack.c.h.b16 %v176
        %v513 = vunpack.c.l.b16 %v177
        %v514 = vunpack.c.h.b16 %v177
        %v515 = vunpack.c.l.b16 %v178
        %v516 = vunpack.c.h.b16 %v178
        %v517 = vunpack.c.l.b16 %v179
        %v518 = vunpack.c.h.b16 %v179
        %v519 = vunpack.c.l.b16 %v180
        %v520 = vunpack.c.h.b16 %v180
        %v521 = vunpack.c.l.b16 %v181
        %v522 = vunpack.c.h.b16 %v181
        %v523 = vunpack.c.l.b16 %v182
        %v524 = vunpack.c.h.b16 %v182
        %v525 = vunpack.c.l.b16 %v183
        %v526 = vunpack.c.h.b16 %v183
        %v527 = vunpack.c.l.b16 %v184
        %v528 = vunpack.c.h.b16 %v184
        %v529 = vunpack.c.l.b16 %v185
        %v530 = vunpack.c.h.b16 %v185
        %v531 = vunpack.c.l.b16 %v186
        %v532 = vunpack.c.h.b16 %v186
        %v533 = vunpack.c.l.b16 %v187
        %v534 = vunpack.c.h.b16 %v187
        %v535 = vunpack.c.l.b16 %v188
        %v536 = vunpack.c.h.b16 %v188
        %v537 = vunpack.c.l.b16 %v189
        %v538 = vunpack.c.h.b16 %v189
        %v539 = vunpack.c.l.b16 %v190
        %v540 = vunpack.c.h.b16 %v190
        %v541 = vunpack.c.l.b16 %v191
        %v542 = vunpack.c.h.b16 %v191
        %v543 = vunpack.c.l.b16 %v192
        %v544 = vunpack.c.h.b16 %v192
        %v545 = vunpack.c.l.b16 %v193
        %v546 = vunpack.c.h.b16 %v193
        %v547 = vunpack.c.l.b16 %v194
        %v548 = vunpack.c.h.b16 %v194
        %v549 = vunpack.c.l.b16 %v195
        %v550 = vunpack.c.h.b16 %v195
        %v551 = vunpack.c.l.b16 %v196
        %v552 = vunpack.c.h.b16 %v196
        %v553 = vunpack.c.l.b16 %v197
        %v554 = vunpack.c.h.b16 %v197
        %v555 = vunpack.c.l.b16 %v198
        %v556 = vunpack.c.h.b16 %v198
        %v557 = vunpack.c.l.b16 %v199
        %v558 = vunpack.c.h.b16 %v199
        %v559 = vunpack.c.l.b16 %v200
        %v560 = vunpack.c.h.b16 %v200
        %v561 = vunpack.c.l.b16 %v201
        %v562 = vunpack.c.h.b16 %v201
        %v563 = vunpack.c.l.b16 %v202
        %v564 = vunpack.c.h.b16 %v202
        %v565 = vunpack.c.l.b16 %v203
        %v566 = vunpack.c.h.b16 %v203
        %v567 = vunpack.c.l.b16 %v204
        %v568 = vunpack.c.h.b16 %v204
        %v569 = vunpack.c.l.b16 %v205
        %v570 = vunpack.c.h.b16 %v205
        %v571 = vunpack.c.l.b16 %v206
        %v572 = vunpack.c.h.b16 %v206
        %v573 = vunpack.c.l.b16 %v207
        %v574 = vunpack.c.h.b16 %v207
        %v575 = vunpack.c.l.b16 %v208
        %v576 = vunpack.c.h.b16 %v208
        %v577 = vunpack.c.l.b16 %v209
        %v578 = vunpack.c.h.b16 %v209
        %v579 = vunpack.c.l.b16 %v210
        %v580 = vunpack.c.h.b16 %v210
        %v581 = vunpack.c.l.b16 %v211
        %v582 = vunpack.c.h.b16 %v211
        %v583 = vunpack.c.l.b16 %v212
        %v584 = vunpack.c.h.b16 %v212
        %v585 = vunpack.c.l.b16 %v213
        %v586 = vunpack.c.h.b16 %v213
        %v587 = vunpack.c.l.b16 %v214
        %v588 = vunpack.c.h.b16 %v214
        %v589 = vunpack.c.l.b16 %v215
        %v590 = vunpack.c.h.b16 %v215
        %v591 = vunpack.c.l.b16 %v216
        %v592 = vunpack.c.h.b16 %v216
        %v593 = vunpack.c.l.b16 %v217
        %v594 = vunpack.c.h.b16 %v217
        %v595 = vunpack.c.l.b16 %v218
        %v596 = vunpack.c.h.b16 %v218
        %v597 = vunpack.c.l.b16 %v219
        %v598 = vunpack.c.h.b16 %v219
        %v599 = vpack.c.b16 %v503, %v499
        %v600 = vpack.c.b16 %v504, %v500
        %v601 = vpack.c.b16 %v505, %v501
        %v602 = vpack.c.b16 %v506, %v502
        %v603 = vpack.c.b16 %v511, %v507
        %v604 = vpack.c.b16 %v512, %v508
        %v605 = vpack.c.b16 %v513, %v509
        %v606 = vpack.c.b16 %v514, %v510
        %v607 = vpack.c.b16 %v519, %v515
        %v608 = vpack.c.b16 %v520, %v516
        %v609 = vpack.c.b16 %v521, %v517
        %v610 = vpack.c.b16 %v522, %v518
        %v611 = vpack.c.b16 %v527, %v523
        %v612 = vpack.c.b16 %v528, %v524
        %v613 = vpack.c.b16 %v529, %v525
        %v614 = vpack.c.b16 %v530, %v526
        %v615 = vpack.c.b16 %v535, %v531
        %v616 = vpack.c.b16 %v536, %v532
        %v617 = vpack.c.b16 %v537, %v533
        %v618 = vpack.c.b16 %v538, %v534
        %v619 = vpack.c.b16 %v543, %v539
        %v620 = vpack.c.b16 %v544, %v540
        %v621 = vpack.c.b16 %v545, %v541
        %v622 = vpack.c.b16 %v546, %v542
        %v623 = vpack.c.b16 %v551, %v547
        %v624 = vpack.c.b16 %v552, %v548
        %v625 = vpack.c.b16 %v553, %v549
        %v626 = vpack.c.b16 %v554, %v550
        %v627 = vpack.c.b16 %v559, %v555
        %v628 = vpack.c.b16 %v560, %v556
        %v629 = vpack.c.b16 %v561, %v557
        %v630 = vpack.c.b16 %v562, %v558
        %v631 = vpack.c.b16 %v567, %v563
        %v632 = vpack.c.b16 %v568, %v564
        %v633 = vpack.c.b16 %v569, %v565
        %v634 = vpack.c.b16 %v570, %v566
        %v635 = vpack.c.b16 %v575, %v571
        %v636 = vpack.c.b16 %v576, %v572
        %v637 = vpack.c.b16 %v577, %v573
        %v638 = vpack.c.b16 %v578, %v574
        %v639 = vpack.c.b16 %v583, %v579
        %v640 = vpack.c.b16 %v584, %v580
        %v641 = vpack.c.b16 %v585, %v581
        %v642 = vpack.c.b16 %v586, %v582
        %v643 = vpack.c.b16 %v591, %v587
        %v644 = vpack.c.b16 %v592, %v588
        %v645 = vpack.c.b16 %v593, %v589
        %v646 = vpack.c.b16 %v594, %v590
        %v647 = vpack.c.b16 %v595, %v595
        %v648 = vpack.c.b16 %v596, %v596
        %v649 = vpack.c.b16 %v597, %v597
        %v650 = vpack.c.b16 %v598, %v598
        %v699 = vmax.bf16 %v599, %v603
        %v700 = vmax.bf16 %v699, %v607
        %v701 = vmax.bf16 %v700, %v611
        %v702 = vmax.bf16 %v701, %v615
        %v703 = vmax.bf16 %v702, %v619
        %v704 = vmax.bf16 %v703, %v623
        %v705 = vmax.bf16 %v704, %v627
        %v706 = vmax.bf16 %v705, %v631
        %v707 = vmax.bf16 %v706, %v635
        %v708 = vmax.bf16 %v707, %v639
        %v709 = vmax.bf16 %v708, %v643
        %vm710 = vcmask 1041408
        %v713 = vsel %vm710, %v647, 4286644096
        %v715 = vmax.bf16 %v709, %v713
        %v716 = vunpack.i.l.bf16 %v715
        %v717 = vunpack.i.h.bf16 %v715
        %v718 = vmax.f32 %v716, %v717
        %v719 = vrot.slane %v718, 4
        %v720 = vmax.f32 %v718, %v719
        %v721 = vrot.slane %v720, 2
        %v722 = vmax.f32 %v720, %v721
        %v723 = vrot.slane %v722, 1
        %v724 = vmax.f32 %v722, %v723
        %v725 = vpack.i.bf16 %v724, %v724
        %v726 = vmax.bf16 %v600, %v604
        %v727 = vmax.bf16 %v726, %v608
        %v728 = vmax.bf16 %v727, %v612
        %v729 = vmax.bf16 %v728, %v616
        %v730 = vmax.bf16 %v729, %v620
        %v731 = vmax.bf16 %v730, %v624
        %v732 = vmax.bf16 %v731, %v628
        %v733 = vmax.bf16 %v732, %v632
        %v734 = vmax.bf16 %v733, %v636
        %v735 = vmax.bf16 %v734, %v640
        %v736 = vmax.bf16 %v735, %v644
        %v738 = vsel %vm710, %v648, 4286644096
        %v740 = vmax.bf16 %v736, %v738
        %v741 = vunpack.i.l.bf16 %v740
        %v742 = vunpack.i.h.bf16 %v740
        %v743 = vmax.f32 %v741, %v742
        %v744 = vrot.slane %v743, 4
        %v745 = vmax.f32 %v743, %v744
        %v746 = vrot.slane %v745, 2
        %v747 = vmax.f32 %v745, %v746
        %v748 = vrot.slane %v747, 1
        %v749 = vmax.f32 %v747, %v748
        %v750 = vpack.i.bf16 %v749, %v749
        %v751 = vmax.bf16 %v601, %v605
        %v752 = vmax.bf16 %v751, %v609
        %v753 = vmax.bf16 %v752, %v613
        %v754 = vmax.bf16 %v753, %v617
        %v755 = vmax.bf16 %v754, %v621
        %v756 = vmax.bf16 %v755, %v625
        %v757 = vmax.bf16 %v756, %v629
        %v758 = vmax.bf16 %v757, %v633
        %v759 = vmax.bf16 %v758, %v637
        %v760 = vmax.bf16 %v759, %v641
        %v761 = vmax.bf16 %v760, %v645
        %v763 = vsel %vm710, %v649, 4286644096
        %v765 = vmax.bf16 %v761, %v763
        %v766 = vunpack.i.l.bf16 %v765
        %v767 = vunpack.i.h.bf16 %v765
        %v768 = vmax.f32 %v766, %v767
        %v769 = vrot.slane %v768, 4
        %v770 = vmax.f32 %v768, %v769
        %v771 = vrot.slane %v770, 2
        %v772 = vmax.f32 %v770, %v771
        %v773 = vrot.slane %v772, 1
        %v774 = vmax.f32 %v772, %v773
        %v775 = vpack.i.bf16 %v774, %v774
        %v776 = vmax.bf16 %v602, %v606
        %v777 = vmax.bf16 %v776, %v610
        %v778 = vmax.bf16 %v777, %v614
        %v779 = vmax.bf16 %v778, %v618
        %v780 = vmax.bf16 %v779, %v622
        %v781 = vmax.bf16 %v780, %v626
        %v782 = vmax.bf16 %v781, %v630
        %v783 = vmax.bf16 %v782, %v634
        %v784 = vmax.bf16 %v783, %v638
        %v785 = vmax.bf16 %v784, %v642
        %v786 = vmax.bf16 %v785, %v646
        %v788 = vsel %vm710, %v650, 4286644096
        %v790 = vmax.bf16 %v786, %v788
        %v791 = vunpack.i.l.bf16 %v790
        %v792 = vunpack.i.h.bf16 %v790
        %v793 = vmax.f32 %v791, %v792
        %v794 = vrot.slane %v793, 4
        %v795 = vmax.f32 %v793, %v794
        %v796 = vrot.slane %v795, 2
        %v797 = vmax.f32 %v795, %v796
        %v798 = vrot.slane %v797, 1
        %v799 = vmax.f32 %v797, %v798
        %v800 = vpack.i.bf16 %v799, %v799
        %v801 = vunpack.c.l.bf16 %v725
        %v802 = vunpack.c.l.bf16 %v750
        %v803 = vunpack.c.l.bf16 %v775
        %v804 = vunpack.c.l.bf16 %v800
        %v805 = vadd.f32 %v445, %v801
        %v806 = vadd.f32 %v446, %v802
        %v807 = vadd.f32 %v447, %v803
        %v808 = vadd.f32 %v448, %v804
        %v809 = vpack.c.bf16 %v805, %v805
        %v810 = vpack.c.bf16 %v806, %v806
        %v811 = vpack.c.bf16 %v807, %v807
        %v812 = vpack.c.bf16 %v808, %v808
        %v813 = vld [vmem:[%s1] sm:$0xff]
        %v814 = vld [vmem:[%s1 + $0x8] sm:$0xff]
        %v815 = vld [vmem:[%s1 + $0x10] sm:$0xff]
        %v816 = vld [vmem:[%s1 + $0x18] sm:$0xff]
        %v817 = vld [vmem:[%s1 + $0x20] sm:$0xff]
        %v818 = vld [vmem:[%s1 + $0x28] sm:$0xff]
        %v819 = vld [vmem:[%s1 + $0x30] sm:$0xff]
        %v820 = vld [vmem:[%s1 + $0x38] sm:$0xff]
        %v821 = vld [vmem:[%s1 + $0x40] sm:$0xff]
        %v822 = vld [vmem:[%s1 + $0x48] sm:$0xff]
        %v823 = vld [vmem:[%s1 + $0x50] sm:$0xff]
        %v824 = vld [vmem:[%s1 + $0x58] sm:$0xff]
        %v825 = vld [vmem:[%s1 + $0x60] sm:$0xff]
        %v826 = vld [vmem:[%s1 + $0x68] sm:$0xff]
        %v827 = vld [vmem:[%s1 + $0x70] sm:$0xff]
        %v828 = vld [vmem:[%s1 + $0x78] sm:$0xff]
        %v829 = vld [vmem:[%s1 + $0x80] sm:$0xff]
        %v830 = vld [vmem:[%s1 + $0x88] sm:$0xff]
        %v831 = vld [vmem:[%s1 + $0x90] sm:$0xff]
        %v832 = vld [vmem:[%s1 + $0x98] sm:$0xff]
        %v833 = vld [vmem:[%s1 + $0xa0] sm:$0xff]
        %v834 = vld [vmem:[%s1 + $0xa8] sm:$0xff]
        %v835 = vld [vmem:[%s1 + $0xb0] sm:$0xff]
        %v836 = vld [vmem:[%s1 + $0xb8] sm:$0xff]
        %v837 = vld [vmem:[%s1 + $0xc0] sm:$0xff]
        %v838 = vld [vmem:[%s1 + $0xc8] sm:$0xff]
        %v839 = vld [vmem:[%s1 + $0xd0] sm:$0xff]
        %v840 = vld [vmem:[%s1 + $0xd8] sm:$0xff]
        %v841 = vld [vmem:[%s1 + $0xe0] sm:$0xff]
        %v842 = vld [vmem:[%s1 + $0xe8] sm:$0xff]
        %v843 = vld [vmem:[%s1 + $0xf0] sm:$0xff]
        %v844 = vld [vmem:[%s1 + $0xf8] sm:$0xff]
        %v845 = vld [vmem:[%s1 + $0x100] sm:$0xff]
        %v846 = vld [vmem:[%s1 + $0x108] sm:$0xff]
        %v847 = vld [vmem:[%s1 + $0x110] sm:$0xff]
        %v848 = vld [vmem:[%s1 + $0x118] sm:$0xff]
        %v849 = vld [vmem:[%s1 + $0x120] sm:$0xff]
        %v850 = vld [vmem:[%s1 + $0x128] sm:$0xff]
        %v851 = vld [vmem:[%s1 + $0x130] sm:$0xff]
        %v852 = vld [vmem:[%s1 + $0x138] sm:$0xff]
        %v853 = vld [vmem:[%s1 + $0x140] sm:$0xff]
        %v854 = vld [vmem:[%s1 + $0x148] sm:$0xff]
        %v855 = vld [vmem:[%s1 + $0x150] sm:$0xff]
        %v856 = vld [vmem:[%s1 + $0x158] sm:$0xff]
        %v857 = vld [vmem:[%s1 + $0x160] sm:$0xff]
        %v858 = vld [vmem:[%s1 + $0x168] sm:$0xff]
        %v859 = vld [vmem:[%s1 + $0x170] sm:$0xff]
        %v860 = vld [vmem:[%s1 + $0x178] sm:$0xff]
        %v861 = vld [vmem:[%s1 + $0x180] sm:$0xff]
        %v862 = vld [vmem:[%s1 + $0x188] sm:$0xff]
        %v863 = vld [vmem:[%s1 + $0x190] sm:$0xff]
        %v864 = vld [vmem:[%s1 + $0x198] sm:$0xff]
        %v865 = vld [vmem:[%s1 + $0x1a0] sm:$0xff]
        %v866 = vld [vmem:[%s1 + $0x1a8] sm:$0xff]
        %v867 = vld [vmem:[%s1 + $0x1b0] sm:$0xff]
        %v868 = vld [vmem:[%s1 + $0x1b8] sm:$0xff]
        %v869 = vld [vmem:[%s1 + $0x1c0] sm:$0xff]
        %v870 = vld [vmem:[%s1 + $0x1c8] sm:$0xff]
        %v871 = vld [vmem:[%s1 + $0x1d0] sm:$0xff]
        %v872 = vld [vmem:[%s1 + $0x1d8] sm:$0xff]
        %v873 = vld [vmem:[%s1 + $0x1e0] sm:$0xff]
        %v874 = vld [vmem:[%s1 + $0x1e8] sm:$0xff]
        %v875 = vld [vmem:[%s1 + $0x1f0] sm:$0xff]
        %v876 = vld [vmem:[%s1 + $0x1f8] sm:$0xff]
        %v877 = vld [vmem:[%s1 + $0x200] sm:$0xff]
        %v878 = vld [vmem:[%s1 + $0x208] sm:$0xff]
        %v879 = vld [vmem:[%s1 + $0x210] sm:$0xff]
        %v880 = vld [vmem:[%s1 + $0x218] sm:$0xff]
        %v881 = vld [vmem:[%s1 + $0x220] sm:$0xff]
        %v882 = vld [vmem:[%s1 + $0x228] sm:$0xff]
        %v883 = vld [vmem:[%s1 + $0x230] sm:$0xff]
        %v884 = vld [vmem:[%s1 + $0x238] sm:$0xff]
        %v885 = vld [vmem:[%s1 + $0x240] sm:$0xff]
        %v886 = vld [vmem:[%s1 + $0x248] sm:$0xff]
        %v887 = vld [vmem:[%s1 + $0x250] sm:$0xff]
        %v888 = vld [vmem:[%s1 + $0x258] sm:$0xff]
        %v889 = vld [vmem:[%s1 + $0x260] sm:$0xff]
        %v890 = vld [vmem:[%s1 + $0x268] sm:$0xff]
        %v891 = vld [vmem:[%s1 + $0x270] sm:$0xff]
        %v892 = vld [vmem:[%s1 + $0x278] sm:$0xff]
        %v893 = vld [vmem:[%s1 + $0x280] sm:$0xff]
        %v894 = vld [vmem:[%s1 + $0x288] sm:$0xff]
        %v895 = vld [vmem:[%s1 + $0x290] sm:$0xff]
        %v896 = vld [vmem:[%s1 + $0x298] sm:$0xff]
        %v897 = vld [vmem:[%s1 + $0x2a0] sm:$0xff]
        %v898 = vld [vmem:[%s1 + $0x2a8] sm:$0xff]
        %v899 = vld [vmem:[%s1 + $0x2b0] sm:$0xff]
        %v900 = vld [vmem:[%s1 + $0x2b8] sm:$0xff]
        %v901 = vld [vmem:[%s1 + $0x2c0] sm:$0xff]
        %v902 = vld [vmem:[%s1 + $0x2c8] sm:$0xff]
        %v903 = vld [vmem:[%s1 + $0x2d0] sm:$0xff]
        %v904 = vld [vmem:[%s1 + $0x2d8] sm:$0xff]
        %v905 = vld [vmem:[%s1 + $0x2e0] sm:$0xff]
        %v906 = vld [vmem:[%s1 + $0x2e8] sm:$0xff]
        %v907 = vld [vmem:[%s1 + $0x2f0] sm:$0xff]
        %v908 = vld [vmem:[%s1 + $0x2f8] sm:$0xff]
        %v909 = vld [vmem:[%s1 + $0x300] sm:$0xff]
        %v910 = vld [vmem:[%s1 + $0x308] sm:$0xff]
        %v911 = vld [vmem:[%s1 + $0x310] sm:$0xff]
        %v912 = vld [vmem:[%s1 + $0x318] sm:$0xff]
        %v913 = vld [vmem:[%s1 + $0x320] sm:$0xff]
        %v914 = vld [vmem:[%s1 + $0x328] sm:$0xff]
        %v915 = vld [vmem:[%s1 + $0x330] sm:$0xff]
        %v916 = vld [vmem:[%s1 + $0x338] sm:$0xff]
        %v917 = vld [vmem:[%s1 + $0x340] sm:$0xff]
        %v918 = vld [vmem:[%s1 + $0x348] sm:$0xff]
        %v919 = vld [vmem:[%s1 + $0x350] sm:$0xff]
        %v920 = vld [vmem:[%s1 + $0x358] sm:$0xff]
        %v921 = vld [vmem:[%s1 + $0x360] sm:$0xff]
        %v922 = vld [vmem:[%s1 + $0x368] sm:$0xff]
        %v923 = vld [vmem:[%s1 + $0x370] sm:$0xff]
        %v924 = vld [vmem:[%s1 + $0x378] sm:$0xff]
        %v925 = vld [vmem:[%s1 + $0x380] sm:$0xff]
        %v926 = vld [vmem:[%s1 + $0x388] sm:$0xff]
        %v927 = vld [vmem:[%s1 + $0x390] sm:$0xff]
        %v928 = vld [vmem:[%s1 + $0x398] sm:$0xff]
        %v929 = vld [vmem:[%s1 + $0x3a0] sm:$0xff]
        %v930 = vld [vmem:[%s1 + $0x3a8] sm:$0xff]
        %v931 = vld [vmem:[%s1 + $0x3b0] sm:$0xff]
        %v932 = vld [vmem:[%s1 + $0x3b8] sm:$0xff]
        %v933 = vld [vmem:[%s1 + $0x3c0] sm:$0xff]
        %v934 = vld [vmem:[%s1 + $0x3c8] sm:$0xff]
        %v935 = vld [vmem:[%s1 + $0x3d0] sm:$0xff]
        %v936 = vld [vmem:[%s1 + $0x3d8] sm:$0xff]
        %v937 = vld [vmem:[%s1 + $0x3e0] sm:$0xff]
        %v938 = vld [vmem:[%s1 + $0x3e8] sm:$0xff]
        %v939 = vld [vmem:[%s1 + $0x3f0] sm:$0xff]
        %v940 = vld [vmem:[%s1 + $0x3f8] sm:$0xff]
        %v941 = vld [vmem:[%s2] sm:$0xf]
        %v1070 = vunpack.c.l.b16 %v813
        %v1071 = vunpack.c.h.b16 %v813
        %v1072 = vunpack.c.l.b16 %v814
        %v1073 = vunpack.c.h.b16 %v814
        %v1074 = vunpack.c.l.b16 %v815
        %v1075 = vunpack.c.h.b16 %v815
        %v1076 = vunpack.c.l.b16 %v816
        %v1077 = vunpack.c.h.b16 %v816
        %v1078 = vunpack.c.l.b16 %v817
        %v1079 = vunpack.c.h.b16 %v817
        %v1080 = vunpack.c.l.b16 %v818
        %v1081 = vunpack.c.h.b16 %v818
        %v1082 = vunpack.c.l.b16 %v819
        %v1083 = vunpack.c.h.b16 %v819
        %v1084 = vunpack.c.l.b16 %v820
        %v1085 = vunpack.c.h.b16 %v820
        %v1086 = vunpack.c.l.b16 %v821
        %v1087 = vunpack.c.h.b16 %v821
        %v1088 = vunpack.c.l.b16 %v822
        %v1089 = vunpack.c.h.b16 %v822
        %v1090 = vunpack.c.l.b16 %v823
        %v1091 = vunpack.c.h.b16 %v823
        %v1092 = vunpack.c.l.b16 %v824
        %v1093 = vunpack.c.h.b16 %v824
        %v1094 = vunpack.c.l.b16 %v825
        %v1095 = vunpack.c.h.b16 %v825
        %v1096 = vunpack.c.l.b16 %v826
        %v1097 = vunpack.c.h.b16 %v826
        %v1098 = vunpack.c.l.b16 %v827
        %v1099 = vunpack.c.h.b16 %v827
        %v1100 = vunpack.c.l.b16 %v828
        %v1101 = vunpack.c.h.b16 %v828
        %v1102 = vunpack.c.l.b16 %v829
        %v1103 = vunpack.c.h.b16 %v829
        %v1104 = vunpack.c.l.b16 %v830
        %v1105 = vunpack.c.h.b16 %v830
        %v1106 = vunpack.c.l.b16 %v831
        %v1107 = vunpack.c.h.b16 %v831
        %v1108 = vunpack.c.l.b16 %v832
        %v1109 = vunpack.c.h.b16 %v832
        %v1110 = vunpack.c.l.b16 %v833
        %v1111 = vunpack.c.h.b16 %v833
        %v1112 = vunpack.c.l.b16 %v834
        %v1113 = vunpack.c.h.b16 %v834
        %v1114 = vunpack.c.l.b16 %v835
        %v1115 = vunpack.c.h.b16 %v835
        %v1116 = vunpack.c.l.b16 %v836
        %v1117 = vunpack.c.h.b16 %v836
        %v1118 = vunpack.c.l.b16 %v837
        %v1119 = vunpack.c.h.b16 %v837
        %v1120 = vunpack.c.l.b16 %v838
        %v1121 = vunpack.c.h.b16 %v838
        %v1122 = vunpack.c.l.b16 %v839
        %v1123 = vunpack.c.h.b16 %v839
        %v1124 = vunpack.c.l.b16 %v840
        %v1125 = vunpack.c.h.b16 %v840
        %v1126 = vunpack.c.l.b16 %v841
        %v1127 = vunpack.c.h.b16 %v841
        %v1128 = vunpack.c.l.b16 %v842
        %v1129 = vunpack.c.h.b16 %v842
        %v1130 = vunpack.c.l.b16 %v843
        %v1131 = vunpack.c.h.b16 %v843
        %v1132 = vunpack.c.l.b16 %v844
        %v1133 = vunpack.c.h.b16 %v844
        %v1134 = vunpack.c.l.b16 %v845
        %v1135 = vunpack.c.h.b16 %v845
        %v1136 = vunpack.c.l.b16 %v846
        %v1137 = vunpack.c.h.b16 %v846
        %v1138 = vunpack.c.l.b16 %v847
        %v1139 = vunpack.c.h.b16 %v847
        %v1140 = vunpack.c.l.b16 %v848
        %v1141 = vunpack.c.h.b16 %v848
        %v1142 = vunpack.c.l.b16 %v849
        %v1143 = vunpack.c.h.b16 %v849
        %v1144 = vunpack.c.l.b16 %v850
        %v1145 = vunpack.c.h.b16 %v850
        %v1146 = vunpack.c.l.b16 %v851
        %v1147 = vunpack.c.h.b16 %v851
        %v1148 = vunpack.c.l.b16 %v852
        %v1149 = vunpack.c.h.b16 %v852
        %v1150 = vunpack.c.l.b16 %v853
        %v1151 = vunpack.c.h.b16 %v853
        %v1152 = vunpack.c.l.b16 %v854
        %v1153 = vunpack.c.h.b16 %v854
        %v1154 = vunpack.c.l.b16 %v855
        %v1155 = vunpack.c.h.b16 %v855
        %v1156 = vunpack.c.l.b16 %v856
        %v1157 = vunpack.c.h.b16 %v856
        %v1158 = vunpack.c.l.b16 %v857
        %v1159 = vunpack.c.h.b16 %v857
        %v1160 = vunpack.c.l.b16 %v858
        %v1161 = vunpack.c.h.b16 %v858
        %v1162 = vunpack.c.l.b16 %v859
        %v1163 = vunpack.c.h.b16 %v859
        %v1164 = vunpack.c.l.b16 %v860
        %v1165 = vunpack.c.h.b16 %v860
        %v1166 = vunpack.c.l.b16 %v861
        %v1167 = vunpack.c.h.b16 %v861
        %v1168 = vunpack.c.l.b16 %v862
        %v1169 = vunpack.c.h.b16 %v862
        %v1170 = vunpack.c.l.b16 %v863
        %v1171 = vunpack.c.h.b16 %v863
        %v1172 = vunpack.c.l.b16 %v864
        %v1173 = vunpack.c.h.b16 %v864
        %v1174 = vunpack.c.l.b16 %v865
        %v1175 = vunpack.c.h.b16 %v865
        %v1176 = vunpack.c.l.b16 %v866
        %v1177 = vunpack.c.h.b16 %v866
        %v1178 = vunpack.c.l.b16 %v867
        %v1179 = vunpack.c.h.b16 %v867
        %v1180 = vunpack.c.l.b16 %v868
        %v1181 = vunpack.c.h.b16 %v868
        %v1182 = vunpack.c.l.b16 %v869
        %v1183 = vunpack.c.h.b16 %v869
        %v1184 = vunpack.c.l.b16 %v870
        %v1185 = vunpack.c.h.b16 %v870
        %v1186 = vunpack.c.l.b16 %v871
        %v1187 = vunpack.c.h.b16 %v871
        %v1188 = vunpack.c.l.b16 %v872
        %v1189 = vunpack.c.h.b16 %v872
        %v1190 = vunpack.c.l.b16 %v873
        %v1191 = vunpack.c.h.b16 %v873
        %v1192 = vunpack.c.l.b16 %v874
        %v1193 = vunpack.c.h.b16 %v874
        %v1194 = vunpack.c.l.b16 %v875
        %v1195 = vunpack.c.h.b16 %v875
        %v1196 = vunpack.c.l.b16 %v876
        %v1197 = vunpack.c.h.b16 %v876
        %v1198 = vunpack.c.l.b16 %v877
        %v1199 = vunpack.c.h.b16 %v877
        %v1200 = vunpack.c.l.b16 %v878
        %v1201 = vunpack.c.h.b16 %v878
        %v1202 = vunpack.c.l.b16 %v879
        %v1203 = vunpack.c.h.b16 %v879
        %v1204 = vunpack.c.l.b16 %v880
        %v1205 = vunpack.c.h.b16 %v880
        %v1206 = vunpack.c.l.b16 %v881
        %v1207 = vunpack.c.h.b16 %v881
        %v1208 = vunpack.c.l.b16 %v882
        %v1209 = vunpack.c.h.b16 %v882
        %v1210 = vunpack.c.l.b16 %v883
        %v1211 = vunpack.c.h.b16 %v883
        %v1212 = vunpack.c.l.b16 %v884
        %v1213 = vunpack.c.h.b16 %v884
        %v1214 = vunpack.c.l.b16 %v885
        %v1215 = vunpack.c.h.b16 %v885
        %v1216 = vunpack.c.l.b16 %v886
        %v1217 = vunpack.c.h.b16 %v886
        %v1218 = vunpack.c.l.b16 %v887
        %v1219 = vunpack.c.h.b16 %v887
        %v1220 = vunpack.c.l.b16 %v888
        %v1221 = vunpack.c.h.b16 %v888
        %v1222 = vunpack.c.l.b16 %v889
        %v1223 = vunpack.c.h.b16 %v889
        %v1224 = vunpack.c.l.b16 %v890
        %v1225 = vunpack.c.h.b16 %v890
        %v1226 = vunpack.c.l.b16 %v891
        %v1227 = vunpack.c.h.b16 %v891
        %v1228 = vunpack.c.l.b16 %v892
        %v1229 = vunpack.c.h.b16 %v892
        %v1230 = vunpack.c.l.b16 %v893
        %v1231 = vunpack.c.h.b16 %v893
        %v1232 = vunpack.c.l.b16 %v894
        %v1233 = vunpack.c.h.b16 %v894
        %v1234 = vunpack.c.l.b16 %v895
        %v1235 = vunpack.c.h.b16 %v895
        %v1236 = vunpack.c.l.b16 %v896
        %v1237 = vunpack.c.h.b16 %v896
        %v1238 = vunpack.c.l.b16 %v897
        %v1239 = vunpack.c.h.b16 %v897
        %v1240 = vunpack.c.l.b16 %v898
        %v1241 = vunpack.c.h.b16 %v898
        %v1242 = vunpack.c.l.b16 %v899
        %v1243 = vunpack.c.h.b16 %v899
        %v1244 = vunpack.c.l.b16 %v900
        %v1245 = vunpack.c.h.b16 %v900
        %v1246 = vunpack.c.l.b16 %v901
        %v1247 = vunpack.c.h.b16 %v901
        %v1248 = vunpack.c.l.b16 %v902
        %v1249 = vunpack.c.h.b16 %v902
        %v1250 = vunpack.c.l.b16 %v903
        %v1251 = vunpack.c.h.b16 %v903
        %v1252 = vunpack.c.l.b16 %v904
        %v1253 = vunpack.c.h.b16 %v904
        %v1254 = vunpack.c.l.b16 %v905
        %v1255 = vunpack.c.h.b16 %v905
        %v1256 = vunpack.c.l.b16 %v906
        %v1257 = vunpack.c.h.b16 %v906
        %v1258 = vunpack.c.l.b16 %v907
        %v1259 = vunpack.c.h.b16 %v907
        %v1260 = vunpack.c.l.b16 %v908
        %v1261 = vunpack.c.h.b16 %v908
        %v1262 = vunpack.c.l.b16 %v909
        %v1263 = vunpack.c.h.b16 %v909
        %v1264 = vunpack.c.l.b16 %v910
        %v1265 = vunpack.c.h.b16 %v910
        %v1266 = vunpack.c.l.b16 %v911
        %v1267 = vunpack.c.h.b16 %v911
        %v1268 = vunpack.c.l.b16 %v912
        %v1269 = vunpack.c.h.b16 %v912
        %v1270 = vunpack.c.l.b16 %v913
        %v1271 = vunpack.c.h.b16 %v913
        %v1272 = vunpack.c.l.b16 %v914
        %v1273 = vunpack.c.h.b16 %v914
        %v1274 = vunpack.c.l.b16 %v915
        %v1275 = vunpack.c.h.b16 %v915
        %v1276 = vunpack.c.l.b16 %v916
        %v1277 = vunpack.c.h.b16 %v916
        %v1278 = vunpack.c.l.b16 %v917
        %v1279 = vunpack.c.h.b16 %v917
        %v1280 = vunpack.c.l.b16 %v918
        %v1281 = vunpack.c.h.b16 %v918
        %v1282 = vunpack.c.l.b16 %v919
        %v1283 = vunpack.c.h.b16 %v919
        %v1284 = vunpack.c.l.b16 %v920
        %v1285 = vunpack.c.h.b16 %v920
        %v1286 = vunpack.c.l.b16 %v921
        %v1287 = vunpack.c.h.b16 %v921
        %v1288 = vunpack.c.l.b16 %v922
        %v1289 = vunpack.c.h.b16 %v922
        %v1290 = vunpack.c.l.b16 %v923
        %v1291 = vunpack.c.h.b16 %v923
        %v1292 = vunpack.c.l.b16 %v924
        %v1293 = vunpack.c.h.b16 %v924
        %v1294 = vunpack.c.l.b16 %v925
        %v1295 = vunpack.c.h.b16 %v925
        %v1296 = vunpack.c.l.b16 %v926
        %v1297 = vunpack.c.h.b16 %v926
        %v1298 = vunpack.c.l.b16 %v927
        %v1299 = vunpack.c.h.b16 %v927
        %v1300 = vunpack.c.l.b16 %v928
        %v1301 = vunpack.c.h.b16 %v928
        %v1302 = vunpack.c.l.b16 %v929
        %v1303 = vunpack.c.h.b16 %v929
        %v1304 = vunpack.c.l.b16 %v930
        %v1305 = vunpack.c.h.b16 %v930
        %v1306 = vunpack.c.l.b16 %v931
        %v1307 = vunpack.c.h.b16 %v931
        %v1308 = vunpack.c.l.b16 %v932
        %v1309 = vunpack.c.h.b16 %v932
        %v1310 = vunpack.c.l.b16 %v933
        %v1311 = vunpack.c.h.b16 %v933
        %v1312 = vunpack.c.l.b16 %v934
        %v1313 = vunpack.c.h.b16 %v934
        %v1314 = vunpack.c.l.b16 %v935
        %v1315 = vunpack.c.h.b16 %v935
        %v1316 = vunpack.c.l.b16 %v936
        %v1317 = vunpack.c.h.b16 %v936
        %v1318 = vunpack.c.l.b16 %v937
        %v1319 = vunpack.c.h.b16 %v937
        %v1320 = vunpack.c.l.b16 %v938
        %v1321 = vunpack.c.h.b16 %v938
        %v1322 = vunpack.c.l.b16 %v939
        %v1323 = vunpack.c.h.b16 %v939
        %v1324 = vunpack.c.l.b16 %v940
        %v1325 = vunpack.c.h.b16 %v940
        %v1326 = vpack.c.b16 %v1074, %v1070
        %v1327 = vpack.c.b16 %v1075, %v1071
        %v1328 = vpack.c.b16 %v1076, %v1072
        %v1329 = vpack.c.b16 %v1077, %v1073
        %v1330 = vpack.c.b16 %v1082, %v1078
        %v1331 = vpack.c.b16 %v1083, %v1079
        %v1332 = vpack.c.b16 %v1084, %v1080
        %v1333 = vpack.c.b16 %v1085, %v1081
        %v1334 = vpack.c.b16 %v1090, %v1086
        %v1335 = vpack.c.b16 %v1091, %v1087
        %v1336 = vpack.c.b16 %v1092, %v1088
        %v1337 = vpack.c.b16 %v1093, %v1089
        %v1338 = vpack.c.b16 %v1098, %v1094
        %v1339 = vpack.c.b16 %v1099, %v1095
        %v1340 = vpack.c.b16 %v1100, %v1096
        %v1341 = vpack.c.b16 %v1101, %v1097
        %v1342 = vpack.c.b16 %v1106, %v1102
        %v1343 = vpack.c.b16 %v1107, %v1103
        %v1344 = vpack.c.b16 %v1108, %v1104
        %v1345 = vpack.c.b16 %v1109, %v1105
        %v1346 = vpack.c.b16 %v1114, %v1110
        %v1347 = vpack.c.b16 %v1115, %v1111
        %v1348 = vpack.c.b16 %v1116, %v1112
        %v1349 = vpack.c.b16 %v1117, %v1113
        %v1350 = vpack.c.b16 %v1122, %v1118
        %v1351 = vpack.c.b16 %v1123, %v1119
        %v1352 = vpack.c.b16 %v1124, %v1120
        %v1353 = vpack.c.b16 %v1125, %v1121
        %v1354 = vpack.c.b16 %v1130, %v1126
        %v1355 = vpack.c.b16 %v1131, %v1127
        %v1356 = vpack.c.b16 %v1132, %v1128
        %v1357 = vpack.c.b16 %v1133, %v1129
        %v1358 = vpack.c.b16 %v1138, %v1134
        %v1359 = vpack.c.b16 %v1139, %v1135
        %v1360 = vpack.c.b16 %v1140, %v1136
        %v1361 = vpack.c.b16 %v1141, %v1137
        %v1362 = vpack.c.b16 %v1146, %v1142
        %v1363 = vpack.c.b16 %v1147, %v1143
        %v1364 = vpack.c.b16 %v1148, %v1144
        %v1365 = vpack.c.b16 %v1149, %v1145
        %v1366 = vpack.c.b16 %v1154, %v1150
        %v1367 = vpack.c.b16 %v1155, %v1151
        %v1368 = vpack.c.b16 %v1156, %v1152
        %v1369 = vpack.c.b16 %v1157, %v1153
        %v1370 = vpack.c.b16 %v1162, %v1158
        %v1371 = vpack.c.b16 %v1163, %v1159
        %v1372 = vpack.c.b16 %v1164, %v1160
        %v1373 = vpack.c.b16 %v1165, %v1161
        %v1374 = vpack.c.b16 %v1170, %v1166
        %v1375 = vpack.c.b16 %v1171, %v1167
        %v1376 = vpack.c.b16 %v1172, %v1168
        %v1377 = vpack.c.b16 %v1173, %v1169
        %v1378 = vpack.c.b16 %v1178, %v1174
        %v1379 = vpack.c.b16 %v1179, %v1175
        %v1380 = vpack.c.b16 %v1180, %v1176
        %v1381 = vpack.c.b16 %v1181, %v1177
        %v1382 = vpack.c.b16 %v1186, %v1182
        %v1383 = vpack.c.b16 %v1187, %v1183
        %v1384 = vpack.c.b16 %v1188, %v1184
        %v1385 = vpack.c.b16 %v1189, %v1185
        %v1386 = vpack.c.b16 %v1194, %v1190
        %v1387 = vpack.c.b16 %v1195, %v1191
        %v1388 = vpack.c.b16 %v1196, %v1192
        %v1389 = vpack.c.b16 %v1197, %v1193
        %v1390 = vpack.c.b16 %v1202, %v1198
        %v1391 = vpack.c.b16 %v1203, %v1199
        %v1392 = vpack.c.b16 %v1204, %v1200
        %v1393 = vpack.c.b16 %v1205, %v1201
        %v1394 = vpack.c.b16 %v1210, %v1206
        %v1395 = vpack.c.b16 %v1211, %v1207
        %v1396 = vpack.c.b16 %v1212, %v1208
        %v1397 = vpack.c.b16 %v1213, %v1209
        %v1398 = vpack.c.b16 %v1218, %v1214
        %v1399 = vpack.c.b16 %v1219, %v1215
        %v1400 = vpack.c.b16 %v1220, %v1216
        %v1401 = vpack.c.b16 %v1221, %v1217
        %v1402 = vpack.c.b16 %v1226, %v1222
        %v1403 = vpack.c.b16 %v1227, %v1223
        %v1404 = vpack.c.b16 %v1228, %v1224
        %v1405 = vpack.c.b16 %v1229, %v1225
        %v1406 = vpack.c.b16 %v1234, %v1230
        %v1407 = vpack.c.b16 %v1235, %v1231
        %v1408 = vpack.c.b16 %v1236, %v1232
        %v1409 = vpack.c.b16 %v1237, %v1233
        %v1410 = vpack.c.b16 %v1242, %v1238
        %v1411 = vpack.c.b16 %v1243, %v1239
        %v1412 = vpack.c.b16 %v1244, %v1240
        %v1413 = vpack.c.b16 %v1245, %v1241
        %v1414 = vpack.c.b16 %v1250, %v1246
        %v1415 = vpack.c.b16 %v1251, %v1247
        %v1416 = vpack.c.b16 %v1252, %v1248
        %v1417 = vpack.c.b16 %v1253, %v1249
        %v1418 = vpack.c.b16 %v1258, %v1254
        %v1419 = vpack.c.b16 %v1259, %v1255
        %v1420 = vpack.c.b16 %v1260, %v1256
        %v1421 = vpack.c.b16 %v1261, %v1257
        %v1422 = vpack.c.b16 %v1266, %v1262
        %v1423 = vpack.c.b16 %v1267, %v1263
        %v1424 = vpack.c.b16 %v1268, %v1264
        %v1425 = vpack.c.b16 %v1269, %v1265
        %v1426 = vpack.c.b16 %v1274, %v1270
        %v1427 = vpack.c.b16 %v1275, %v1271
        %v1428 = vpack.c.b16 %v1276, %v1272
        %v1429 = vpack.c.b16 %v1277, %v1273
        %v1430 = vpack.c.b16 %v1282, %v1278
        %v1431 = vpack.c.b16 %v1283, %v1279
        %v1432 = vpack.c.b16 %v1284, %v1280
        %v1433 = vpack.c.b16 %v1285, %v1281
        %v1434 = vpack.c.b16 %v1290, %v1286
        %v1435 = vpack.c.b16 %v1291, %v1287
        %v1436 = vpack.c.b16 %v1292, %v1288
        %v1437 = vpack.c.b16 %v1293, %v1289
        %v1438 = vpack.c.b16 %v1298, %v1294
        %v1439 = vpack.c.b16 %v1299, %v1295
        %v1440 = vpack.c.b16 %v1300, %v1296
        %v1441 = vpack.c.b16 %v1301, %v1297
        %v1442 = vpack.c.b16 %v1306, %v1302
        %v1443 = vpack.c.b16 %v1307, %v1303
        %v1444 = vpack.c.b16 %v1308, %v1304
        %v1445 = vpack.c.b16 %v1309, %v1305
        %v1446 = vpack.c.b16 %v1314, %v1310
        %v1447 = vpack.c.b16 %v1315, %v1311
        %v1448 = vpack.c.b16 %v1316, %v1312
        %v1449 = vpack.c.b16 %v1317, %v1313
        %v1450 = vpack.c.b16 %v1322, %v1318
        %v1451 = vpack.c.b16 %v1323, %v1319
        %v1452 = vpack.c.b16 %v1324, %v1320
        %v1453 = vpack.c.b16 %v1325, %v1321
        %v1583 = vlaneseq
        %v1584 = vshrl.u32 %v1583, 7
        %v1585 = vsub.s32 0, %v1584
        %v1586 = vrot.slane %v941, %v1585
        %v1587 = vlaneseq
        %v1588 = vshrl.u32 %v1587, 7
        %v1589 = vsub.s32 1, %v1588
        %v1590 = vrot.slane %v941, %v1589
        %v1591 = vlaneseq
        %v1592 = vshrl.u32 %v1591, 7
        %v1593 = vsub.s32 2, %v1592
        %v1594 = vrot.slane %v941, %v1593
        %v1595 = vlaneseq
        %v1596 = vshrl.u32 %v1595, 7
        %v1597 = vsub.s32 3, %v1596
        %v1598 = vrot.slane %v941, %v1597
        %1603 = vmatprep.subr.bf16.mxu0 %v1327
        %1604 = vmatpush1.bf16.msra.mxu0 %v1326
        %1605 = vmatprep.subr.bf16.mxu0 %v1331
        %1606 = vmatpush1.bf16.msra.mxu0 %v1330
        %1607 = vmatprep.subr.bf16.mxu0 %v1335
        %1608 = vmatpush1.bf16.msra.mxu0 %v1334
        %1609 = vmatprep.subr.bf16.mxu0 %v1339
        %1610 = vmatpush1.bf16.msra.mxu0 %v1338
        %1611 = vmatprep.subr.bf16.mxu0 %v1343
        %1612 = vmatpush1.bf16.msra.mxu0 %v1342
        %1613 = vmatprep.subr.bf16.mxu0 %v1347
        %1614 = vmatpush1.bf16.msra.mxu0 %v1346
        %1615 = vmatprep.subr.bf16.mxu0 %v1351
        %1616 = vmatpush1.bf16.msra.mxu0 %v1350
        %1617 = vmatprep.subr.bf16.mxu0 %v1355
        %1618 = vmatpush1.bf16.msra.mxu0 %v1354
        %1619 = vmatprep.subr.bf16.mxu0 %v1359
        %1620 = vmatpush1.bf16.msra.mxu0 %v1358
        %1621 = vmatprep.subr.bf16.mxu0 %v1363
        %1622 = vmatpush1.bf16.msra.mxu0 %v1362
        %1623 = vmatprep.subr.bf16.mxu0 %v1367
        %1624 = vmatpush1.bf16.msra.mxu0 %v1366
        %1625 = vmatprep.subr.bf16.mxu0 %v1371
        %1626 = vmatpush1.bf16.msra.mxu0 %v1370
        %1627 = vmatprep.subr.bf16.mxu0 %v1375
        %1628 = vmatpush1.bf16.msra.mxu0 %v1374
        %1629 = vmatprep.subr.bf16.mxu0 %v1379
        %1630 = vmatpush1.bf16.msra.mxu0 %v1378
        %1631 = vmatprep.subr.bf16.mxu0 %v1383
        %1632 = vmatpush1.bf16.msra.mxu0 %v1382
        %1633 = vmatprep.subr.bf16.mxu0 %v1387
        %1634 = vmatpush1.bf16.msra.mxu0 %v1386
        %1635 = vmatprep.mubr.bf16.mxu0 %v810
        %1636 = vmatmul.mubr.bf16.gmra.mrb[0].mxu0 %v809
        %v1637 = vpop.f32.mrb[0].mxu0
        %v1638 = vadd.f32 %v1586, %v1637
        %v1639 = vpop.f32.mrb[0].mxu0
        %v1640 = vadd.f32 %v1590, %v1639
        %v1641 = vpop.f32.mrb[0].mxu0
        %v1642 = vpop.f32.mrb[0].mxu0
        %1643 = vdwg.mxu0
        %1644 = vmatprep.subr.bf16.mxu0 %v1391
        %1645 = vmatpush1.bf16.msra.mxu0 %v1390
        %1646 = vmatprep.subr.bf16.mxu0 %v1395
        %1647 = vmatpush1.bf16.msra.mxu0 %v1394
        %1648 = vmatprep.subr.bf16.mxu0 %v1399
        %1649 = vmatpush1.bf16.msra.mxu0 %v1398
        %1650 = vmatprep.subr.bf16.mxu0 %v1403
        %1651 = vmatpush1.bf16.msra.mxu0 %v1402
        %1652 = vmatprep.subr.bf16.mxu0 %v1407
        %1653 = vmatpush1.bf16.msra.mxu0 %v1406
        %1654 = vmatprep.subr.bf16.mxu0 %v1411
        %1655 = vmatpush1.bf16.msra.mxu0 %v1410
        %1656 = vmatprep.subr.bf16.mxu0 %v1415
        %1657 = vmatpush1.bf16.msra.mxu0 %v1414
        %1658 = vmatprep.subr.bf16.mxu0 %v1419
        %1659 = vmatpush1.bf16.msra.mxu0 %v1418
        %1660 = vmatprep.subr.bf16.mxu0 %v1423
        %1661 = vmatpush1.bf16.msra.mxu0 %v1422
        %1662 = vmatprep.subr.bf16.mxu0 %v1427
        %1663 = vmatpush1.bf16.msra.mxu0 %v1426
        %1664 = vmatprep.subr.bf16.mxu0 %v1431
        %1665 = vmatpush1.bf16.msra.mxu0 %v1430
        %1666 = vmatprep.subr.bf16.mxu0 %v1435
        %1667 = vmatpush1.bf16.msra.mxu0 %v1434
        %1668 = vmatprep.subr.bf16.mxu0 %v1439
        %1669 = vmatpush1.bf16.msra.mxu0 %v1438
        %1670 = vmatprep.subr.bf16.mxu0 %v1443
        %1671 = vmatpush1.bf16.msra.mxu0 %v1442
        %1672 = vmatprep.subr.bf16.mxu0 %v1447
        %1673 = vmatpush1.bf16.msra.mxu0 %v1446
        %1674 = vmatprep.subr.bf16.mxu0 %v1451
        %1675 = vmatpush1.bf16.msra.mxu0 %v1450
        %1676 = vmatprep.mubr.bf16.mxu0 %v812
        %1677 = vmatmul.mubr.bf16.gmra.mrb[0].mxu0 %v811
        %v1678 = vpop.f32.mrb[0].mxu0
        %v1679 = vadd.f32 %v1638, %v1678
        %v1680 = vpop.f32.mrb[0].mxu0
        %v1681 = vadd.f32 %v1640, %v1680
        %v1682 = vpop.f32.mrb[0].mxu0
        %v1683 = vpop.f32.mrb[0].mxu0
        %1684 = vdwg.mxu0
        %1685 = vmatprep.subr.bf16.mxu0 %v1329
        %1686 = vmatpush1.bf16.msra.mxu0 %v1328
        %1687 = vmatprep.subr.bf16.mxu0 %v1333
        %1688 = vmatpush1.bf16.msra.mxu0 %v1332
        %1689 = vmatprep.subr.bf16.mxu0 %v1337
        %1690 = vmatpush1.bf16.msra.mxu0 %v1336
        %1691 = vmatprep.subr.bf16.mxu0 %v1341
        %1692 = vmatpush1.bf16.msra.mxu0 %v1340
        %1693 = vmatprep.subr.bf16.mxu0 %v1345
        %1694 = vmatpush1.bf16.msra.mxu0 %v1344
        %1695 = vmatprep.subr.bf16.mxu0 %v1349
        %1696 = vmatpush1.bf16.msra.mxu0 %v1348
        %1697 = vmatprep.subr.bf16.mxu0 %v1353
        %1698 = vmatpush1.bf16.msra.mxu0 %v1352
        %1699 = vmatprep.subr.bf16.mxu0 %v1357
        %1700 = vmatpush1.bf16.msra.mxu0 %v1356
        %1701 = vmatprep.subr.bf16.mxu0 %v1361
        %1702 = vmatpush1.bf16.msra.mxu0 %v1360
        %1703 = vmatprep.subr.bf16.mxu0 %v1365
        %1704 = vmatpush1.bf16.msra.mxu0 %v1364
        %1705 = vmatprep.subr.bf16.mxu0 %v1369
        %1706 = vmatpush1.bf16.msra.mxu0 %v1368
        %1707 = vmatprep.subr.bf16.mxu0 %v1373
        %1708 = vmatpush1.bf16.msra.mxu0 %v1372
        %1709 = vmatprep.subr.bf16.mxu0 %v1377
        %1710 = vmatpush1.bf16.msra.mxu0 %v1376
        %1711 = vmatprep.subr.bf16.mxu0 %v1381
        %1712 = vmatpush1.bf16.msra.mxu0 %v1380
        %1713 = vmatprep.subr.bf16.mxu0 %v1385
        %1714 = vmatpush1.bf16.msra.mxu0 %v1384
        %1715 = vmatprep.subr.bf16.mxu0 %v1389
        %1716 = vmatpush1.bf16.msra.mxu0 %v1388
        %1717 = vmatprep.mubr.bf16.mxu0 %v810
        %1718 = vmatmul.mubr.bf16.gmra.mrb[0].mxu0 %v809
        %v1719 = vpop.f32.mrb[0].mxu0
        %v1720 = vadd.f32 %v1594, %v1719
        %v1721 = vpop.f32.mrb[0].mxu0
        %v1722 = vadd.f32 %v1598, %v1721
        %v1723 = vpop.f32.mrb[0].mxu0
        %v1724 = vpop.f32.mrb[0].mxu0
        %1725 = vdwg.mxu0
        %1726 = vmatprep.subr.bf16.mxu0 %v1393
        %1727 = vmatpush1.bf16.msra.mxu0 %v1392
        %1728 = vmatprep.subr.bf16.mxu0 %v1397
        %1729 = vmatpush1.bf16.msra.mxu0 %v1396
        %1730 = vmatprep.subr.bf16.mxu0 %v1401
        %1731 = vmatpush1.bf16.msra.mxu0 %v1400
        %1732 = vmatprep.subr.bf16.mxu0 %v1405
        %1733 = vmatpush1.bf16.msra.mxu0 %v1404
        %1734 = vmatprep.subr.bf16.mxu0 %v1409
        %1735 = vmatpush1.bf16.msra.mxu0 %v1408
        %1736 = vmatprep.subr.bf16.mxu0 %v1413
        %1737 = vmatpush1.bf16.msra.mxu0 %v1412
        %1738 = vmatprep.subr.bf16.mxu0 %v1417
        %1739 = vmatpush1.bf16.msra.mxu0 %v1416
        %1740 = vmatprep.subr.bf16.mxu0 %v1421
        %1741 = vmatpush1.bf16.msra.mxu0 %v1420
        %1742 = vmatprep.subr.bf16.mxu0 %v1425
        %1743 = vmatpush1.bf16.msra.mxu0 %v1424
        %1744 = vmatprep.subr.bf16.mxu0 %v1429
        %1745 = vmatpush1.bf16.msra.mxu0 %v1428
        %1746 = vmatprep.subr.bf16.mxu0 %v1433
        %1747 = vmatpush1.bf16.msra.mxu0 %v1432
        %1748 = vmatprep.subr.bf16.mxu0 %v1437
        %1749 = vmatpush1.bf16.msra.mxu0 %v1436
        %1750 = vmatprep.subr.bf16.mxu0 %v1441
        %1751 = vmatpush1.bf16.msra.mxu0 %v1440
        %1752 = vmatprep.subr.bf16.mxu0 %v1445
        %1753 = vmatpush1.bf16.msra.mxu0 %v1444
        %1754 = vmatprep.subr.bf16.mxu0 %v1449
        %1755 = vmatpush1.bf16.msra.mxu0 %v1448
        %1756 = vmatprep.subr.bf16.mxu0 %v1453
        %1757 = vmatpush1.bf16.msra.mxu0 %v1452
        %1758 = vmatprep.mubr.bf16.mxu0 %v812
        %1759 = vmatmul.mubr.bf16.gmra.mrb[0].mxu0 %v811
        %v1760 = vpop.f32.mrb[0].mxu0
        %v1761 = vadd.f32 %v1720, %v1760
        %v1762 = vpop.f32.mrb[0].mxu0
        %v1763 = vadd.f32 %v1722, %v1762
        %v1764 = vpop.f32.mrb[0].mxu0
        %v1765 = vpop.f32.mrb[0].mxu0
        %1766 = vdwg.mxu0
        %v1767 = vmul.f32 %v1679, %v1679
        %v1768 = vmul.f32 %v1681, %v1681
        %v1769 = vmul.f32 %v1761, %v1761
        %v1770 = vmul.f32 %v1763, %v1763
        %vm1771 = vcmask 1040384
        %v1772 = vsel %vm1771, %v1767, 0.0
        %v1773 = vsel %vm1771, %v1768, 0.0
        %v1774 = vadd.f32 %v1772, %v1773
        %v1775 = vsel %vm1771, %v1769, 0.0
        %v1776 = vadd.f32 %v1774, %v1775
        %v1777 = vsel %vm1771, %v1770, 0.0
        %v1778 = vadd.f32 %v1776, %v1777
        %1779 = vadd.xlane.f32.xlu0 %v1778
        %v1780 = vpop.xlane.xlu0 %1779
        %v1781 = vmax.f32 %v1780, 1e-24
        %v1782 = vrsqrt.pop %v1781
        %v1783 = vmul.f32 %v1679, %v1782
        %v1784 = vmul.f32 %v1681, %v1782
        %v1785 = vmul.f32 %v1761, %v1782
        %v1786 = vmul.f32 %v1763, %v1782
        %v1791 = vcombine.low %v1783, %v1784
        %v1792 = vcombine.low %v1785, %v1786
        %v1794 = vunpack.c.l.s4 1966171168
        %v1795 = vunpack.c.0.s8 %v1794
        %v1796 = vlaneseq
        %v1797 = vshrl.u32 %v1796, 7
        %v1798 = vsub.s32 %v1795, %v1797
        %v1799 = vrot.slane %v1791, %v1798
        %v1801 = vunpack.c.l.s4 1966171168
        %v1802 = vunpack.c.0.s8 %v1801
        %v1803 = vlaneseq
        %v1804 = vshrl.u32 %v1803, 7
        %v1805 = vsub.s32 %v1802, %v1804
        %v1806 = vrot.slane %v1792, %v1805
        %v1807 = vcombine.low %v1799, %v1806
        %v1809 = vunpack.c.l.s4 1966171168
        %v1810 = vunpack.c.0.s8 %v1809
        %v1811 = vlaneseq
        %v1812 = vshrl.u32 %v1811, 7
        %v1813 = vsub.s32 %v1810, %v1812
        %v1814 = vrot.slane %v1807, %v1813
        %v1816 = vlaneseq
        %vm1817 = vcmp.ge.s32.totalorder %v1816, 0
        %vm1818 = vcmp.lt.s32.totalorder %v1816, 512
        %vm1819 = vmand %vm1817, %vm1818
        %1820 = vst.msk [vmem:[%s163] sm:$0xf] %vm1819, %v1814
        %s1821 = sand.u32 %s93, 1
        %s1822 = scalar_lea.sflag [#allocation3], %s1821
        %s1823 = sand.u32 %s93, 1
        %s1824 = smul.addr %s1823, 4
        %s1825 = scalar_lea.vmem [#allocation2], %s1824
        // Predicated region
        $region33: #{tpu_custom_call.1} parent=31 // pred_check
          %p1826 = pneg %p103
        $region34: #{tpu_custom_call.1} parent=31 // pred_check_branch
          %1828 = sbr.rel (%p1826) target = $region36
        $region35: #{tpu_custom_call.1} parent=31 // pred_region
          %s1830 = ssub.s32 64, 64
          %1831 = vsyncadd %s1822, %s1830
          %s1832 = smul.addr %s17, 4
          %s1833 = smul.addr %s1832, 16
          %s1834 = scalar_lea.hbm %s3, %s1833
          %s1836 = sshll.u32 %s1825, 4
          %s1837 = int_to_ptr.vmem [resolvable:$true] %s1836
          %1839 = dma.vmem_to_hbm [thread:$0]  %s1837, 64, %s1834, %s1822
        $region36: #{tpu_custom_call.1} parent=31 // pred_fallthru
          _
      $region32: #{tpu_custom_call.1} parent=5 // pred_fallthru
        _
      %p1840 = scmp.le.s32.totalorder 2, %s12
      // Predicated region
      $region37: #{tpu_custom_call.1} parent=5 // pred_check
        %p1841 = pneg %p1840
      $region38: #{tpu_custom_call.1} parent=5 // pred_check_branch
        %1843 = sbr.rel (%p1841) target = $region40
      $region39: #{tpu_custom_call.1} parent=5 // pred_region
        %s1844 = ssub.s32 %s12, 2
        // Predicated region
        $region41: #{tpu_custom_call.1} parent=39 // pred_check
          %p1845 = pneg %p109
        $region42: #{tpu_custom_call.1} parent=39 // pred_check_branch
          %1847 = sbr.rel (%p1845) target = $region44
        $region43: #{tpu_custom_call.1} parent=39 // pred_region
          %s1848 = sand.u32 %s94, 1
          %s1849 = scalar_lea.sflag [#allocation3], %s1848
          %s1850 = sand.u32 %s94, 1
          %s1851 = smul.addr %s1850, 4
          %s1852 = scalar_lea.vmem [#allocation2], %s1851
          %1853 = dma.done %s1849, 64
        $region44: #{tpu_custom_call.1} parent=39 // pred_fallthru
          _
      $region40: #{tpu_custom_call.1} parent=5 // pred_fallthru
        _
    $region6: #{tpu_custom_call.1} parent=1 // loop_footer
      %s16 = sadd.s32 1, %s12
    $region7: #{tpu_custom_call.1} parent=1 // loop_footer_branch
      %11 = sbr.rel target = $region3
    $region8: #{tpu_custom_call.1} parent=1 // loop_exit
      _
    %1854 = vsyncpa [#allocation3], 1
    %s1855 = scalar_lea.sflag [#allocation3], 1
    %1856 = vsyncpa %s1855, 1

</llo_original>
